<compile_context>
chip_gen: v7x
topology: tpu7x:2x2x1
jax: 0.10.0
libtpu: 0.0.40
codegen_flags: <defaults>
</compile_context>

<pallas_src>
import functools

import jax
import jax.numpy as jnp
from jax import lax
from jax.experimental import pallas as pl
from jax.experimental.pallas import tpu as pltpu

# ----------------------- static configuration -----------------------
NUM_JOINTS = 16
FEATURE_DIM = 8            # J * F = 128 -> one full lane width
HIDDEN_DIM = 128           # small stand-in for the real 512; kernel is shape-agnostic
OUTPUT_DIM = 1
BATCH = 16
INIT_S = 10.0
NEG_SLOPE = 0.01           # nn.LeakyReLU default


def _binary_kinematic_tree(num_joints):
    """Branching kinematic tree (topologically ordered, prefix-consistent paths)."""
    tree = []
    for j in range(num_joints):
        path = [j]
        p = j
        while p > 0:
            p = (p - 1) // 2
            path.append(p)
        tree.append(path[::-1])
    return tree


MAPPING_RELATIONS = _binary_kinematic_tree(NUM_JOINTS)


def _leaky_relu(v):
    return jnp.where(v > 0, v, NEG_SLOPE * v)


def _validate_tree(tree):
    # Implicit contract of HyperEnbedding: every parent path appears earlier.
    seen = set()
    for rel in tree:
        assert len(rel) >= 1
        if len(rel) > 1:
            assert tuple(rel[:-1]) in seen, (
                "mapping_relations must be topologically ordered, prefix-consistent paths")
        seen.add(tuple(rel))


def _pick_tm(batch):
    """Largest single batch tile (review: no TM=8 fallback)."""
    assert batch % 16 == 0, "batch must be a multiple of 16"
    if batch <= 512:
        return batch                      # grid=(1,)
    for tm in (512, 256, 128):
        if batch % tm == 0:
            return tm                     # lane-dense (1, TM) output stays legal
    raise ValueError("batches > 512 must be a multiple of 128")


# ----------------------------- kernel -------------------------------
def _hyper_kernel(tree, x_ref, wxbe_ref, wp_ref, w1_ref, w234_ref,
                  b1234_ref, w5b5_ref, out_ref):
    F = FEATURE_DIM

    # Lane-dense encoder base term for all nodes at once: [TM, J*F].
    # x_ref already holds x[:, rel[-1]] repeated F times per node (wrapper).
    base = x_ref[...] * wxbe_ref[0:1, :] + wxbe_ref[1:2, :]

    # ---- HyperEnbedding: static tree unroll; parent @ Wp_i on the MXU ----
    emb = {}
    parts = []
    for i, rel in enumerate(tree):
        e = base[:, i * F:(i + 1) * F]                    # [TM, F] (static lane slice)
        if len(rel) > 1:
            parent = emb[tuple(rel[:-1])]                 # [TM, F] pre-activation
            e = e + jnp.dot(parent, wp_ref[i],
                            preferred_element_type=jnp.float32)
        emb[tuple(rel)] = e                               # pre-activation (as in PyTorch)
        parts.append(e)
    # Register-side lane concat (no scratch slab / masked 8-lane stores).
    h = _leaky_relu(jnp.concatenate(parts, axis=1))       # [TM, J*F]

    # ---- MLP hidden layers: f32 MXU matmuls, lane-dense [TM,128] tiles ----
    h = _leaky_relu(jnp.dot(h, w1_ref[...],
                            preferred_element_type=jnp.float32) + b1234_ref[0:1, :])
    h = _leaky_relu(jnp.dot(h, w234_ref[0],
                            preferred_element_type=jnp.float32) + b1234_ref[1:2, :])
    h = _leaky_relu(jnp.dot(h, w234_ref[1],
                            preferred_element_type=jnp.float32) + b1234_ref[2:3, :])
    h = _leaky_relu(jnp.dot(h, w234_ref[2],
                            preferred_element_type=jnp.float32) + b1234_ref[3:4, :])

    # ---- OUTPUT_DIM=1 head as w5 @ h^T on the MXU -> lane-dense (1, TM) row ----
    out_row = lax.dot_general(w5b5_ref[0:1, :], h,
                              dimension_numbers=(((1,), (1,)), ((), ())),
                              preferred_element_type=jnp.float32)   # [1, TM]
    out_ref[...] = out_row + w5b5_ref[1:2, 0:1]


# ----------------------------- wrapper -------------------------------
def hyper_network_forward(x, params, tree):
    """Returns (mlp_output [B, OUTPUT_DIM], clamped s [1])."""
    B, J = x.shape
    F, H, O = FEATURE_DIM, HIDDEN_DIM, OUTPUT_DIM
    JF = J * F
    assert J == NUM_JOINTS and len(tree) == J
    _validate_tree(tree)
    TM = _pick_tm(B)
    G = B // TM

    # Layout plumbing (not compute hoisting): gather each node's joint column
    # (rel[-1]) and repeat it F times so the kernel's base term is one
    # full-lane-width FMA matching the h layout.
    cols = jnp.asarray([rel[-1] for rel in tree], jnp.int32)
    x_rep = jnp.repeat(x[:, cols], F, axis=1)                        # [B, J*F]

    flops = 2 * B * (J * F * F + JF * H + 3 * H * H + H)
    bytes_accessed = 4 * (B * JF + B * O + J * F * F + 2 * JF
                          + JF * H + 3 * H * H + 4 * H + 2 * H)

    kernel = functools.partial(_hyper_kernel, tree)
    out2d = pl.pallas_call(
        kernel,
        out_shape=jax.ShapeDtypeStruct((G, TM), jnp.float32),
        grid_spec=pltpu.PrefetchScalarGridSpec(
            num_scalar_prefetch=0,
            grid=(G,),
            in_specs=[
                pl.BlockSpec((TM, JF), lambda i: (i, 0)),        # x batch tile
                pl.BlockSpec((2, JF), lambda i: (0, 0)),         # wx / be (flattened)
                pl.BlockSpec((J, F, F), lambda i: (0, 0, 0)),    # per-node parent weights
                pl.BlockSpec((JF, H), lambda i: (0, 0)),         # w1
                pl.BlockSpec((3, H, H), lambda i: (0, 0, 0)),    # w2..w4
                pl.BlockSpec((4, H), lambda i: (0, 0)),          # b1..b4
                pl.BlockSpec((2, H), lambda i: (0, 0)),          # w5 / b5
            ],
            out_specs=pl.BlockSpec((1, TM), lambda i: (i, 0)),   # lane-dense row
        ),
        compiler_params=pltpu.CompilerParams(
            dimension_semantics=("parallel",)),                  # megacore on v7x
        cost_estimate=pl.CostEstimate(flops=flops, transcendentals=0,
                                      bytes_accessed=bytes_accessed),
    )(x_rep, params["wxbe"], params["wp"], params["w1"], params["w234"],
      params["b1234"], params["w5b5"])

    out = out2d.reshape(B, O)
    s_clamped = jnp.clip(params["s"], 0.001, 1000.0)   # tiny scalar glue
    return out, s_clamped


# -------------------- pure-JAX f32 reference (sanity) --------------------
def hyper_network_ref(x, params, tree):
    F = FEATURE_DIM
    J = len(tree)
    wp = params["wp"]
    wx = params["wxbe"][0].reshape(J, F)
    be = params["wxbe"][1].reshape(J, F)
    emb, parts = {}, []
    for i, rel in enumerate(tree):
        e = x[:, rel[-1]:rel[-1] + 1] * wx[i][None, :] + be[i][None, :]
        if len(rel) > 1:
            e = e + emb[tuple(rel[:-1])] @ wp[i]
        emb[tuple(rel)] = e
        parts.append(e)
    h = jnp.concatenate(parts, axis=1)
    ws = [params["w1"], params["w234"][0], params["w234"][1], params["w234"][2]]
    bs = [params["b1234"][k][None, :] for k in range(4)]
    for wk, bk in zip(ws, bs):
        h = _leaky_relu(h)
        h = h @ wk + bk
    h = _leaky_relu(h)
    out = h @ params["w5b5"][0][:, None] + params["w5b5"][1, 0]
    return out, jnp.clip(params["s"], 0.001, 1000.0)


# ------------------------- param construction ------------------------
def init_params(key, tree):
    J, F, H, O = NUM_JOINTS, FEATURE_DIM, HIDDEN_DIM, OUTPUT_DIM
    ks = jax.random.split(key, 13)

    def uni(k, shape, fan_in):
        bound = 1.0 / jnp.sqrt(jnp.float32(fan_in))
        return jax.random.uniform(k, shape, jnp.float32, -bound, bound)

    # Per-node Linear(F+1 -> F) split as e = parent @ Wp + x_j * wx + be
    # (Wp zeroed for root nodes, i.e. Linear(1 -> F)).  Stored (in, out).
    wp = uni(ks[0], (J, F, F), F + 1)
    non_root = jnp.asarray([1.0 if len(rel) > 1 else 0.0 for rel in tree],
                           jnp.float32)
    wp = wp * non_root[:, None, None]
    wx = uni(ks[1], (J, F), F + 1)
    be = uni(ks[2], (J, F), F + 1)

    w1 = uni(ks[3], (J * F, H), J * F)
    b1 = uni(ks[4], (1, H), J * F)
    w2 = uni(ks[5], (H, H), H)
    b2 = uni(ks[6], (1, H), H)
    w3 = uni(ks[7], (H, H), H)
    b3 = uni(ks[8], (1, H), H)
    w4 = uni(ks[9], (H, H), H)
    b4 = uni(ks[10], (1, H), H)
    w5 = uni(ks[11], (H, O), H)
    b5 = uni(ks[12], (1, O), H)

    return dict(
        wxbe=jnp.stack([wx.reshape(-1), be.reshape(-1)], axis=0),    # [2, J*F]
        wp=wp,                                                        # [J, F, F]
        w1=w1,                                                        # [J*F, H]
        w234=jnp.stack([w2, w3, w4], axis=0),                         # [3, H, H]
        b1234=jnp.concatenate([b1, b2, b3, b4], axis=0),              # [4, H]
        w5b5=jnp.concatenate(
            [w5.T, jnp.pad(b5, ((0, 0), (0, H - O)))], axis=0),       # [2, H]
        s=jnp.array([INIT_S], jnp.float32),
    )


# ------------------------------- main --------------------------------
if __name__ == "__main__":
    tree = MAPPING_RELATIONS
    key = jax.random.PRNGKey(0)
    pkey, xkey = jax.random.split(key)
    params = init_params(pkey, tree)
    x = jax.random.normal(xkey, (BATCH, NUM_JOINTS), jnp.float32)

    out, s = hyper_network_forward(x, params, tree)
    out = jax.block_until_ready(out)
    s = jax.block_until_ready(s)

    ref_out, ref_s = hyper_network_ref(x, params, tree)
    assert out.shape == (BATCH, OUTPUT_DIM)
    assert s.shape == (1,)
    max_err = float(jnp.max(jnp.abs(out - ref_out)))
    assert jnp.allclose(out, ref_out, atol=1e-2, rtol=1e-2), max_err
    assert jnp.allclose(s, ref_s)

    # TODO(synk): flatten=True branch (plain nn.Linear encoder) not implemented;
    # module default flatten=False (HyperEnbedding) path only.
    print("KERNEL_OK")
</pallas_src>

<mosaic_0001>
module attributes {stable_mosaic.version = 11 : i64} {
  func.func @_hyper_kernel(%arg0: i32, %arg1: memref<16x128xf32, #tpu.memory_space<vmem>>, %arg2: memref<2x128xf32, #tpu.memory_space<vmem>>, %arg3: memref<16x8x8xf32, #tpu.memory_space<vmem>>, %arg4: memref<128x128xf32, #tpu.memory_space<vmem>>, %arg5: memref<3x128x128xf32, #tpu.memory_space<vmem>>, %arg6: memref<4x128xf32, #tpu.memory_space<vmem>>, %arg7: memref<2x128xf32, #tpu.memory_space<vmem>>, %arg8: memref<1x16xf32, #tpu.memory_space<vmem>>) attributes {dimension_semantics = [#tpu.dimension_semantics<parallel>], iteration_bounds = array<i64: 1>, scalar_prefetch = 0 : i64, scratch_operands = 0 : i64, tpu.core_type = #tpu.core_type<tc>, window_params = [{transform_indices = @transform_0, window_bounds = array<i64: 16, 128>}, {pipeline_mode = #tpu.pipeline_mode<synchronous>, transform_indices = @transform_1, window_bounds = array<i64: 2, 128>}, {pipeline_mode = #tpu.pipeline_mode<synchronous>, transform_indices = @transform_2, window_bounds = array<i64: 16, 8, 8>}, {pipeline_mode = #tpu.pipeline_mode<synchronous>, transform_indices = @transform_3, window_bounds = array<i64: 128, 128>}, {pipeline_mode = #tpu.pipeline_mode<synchronous>, transform_indices = @transform_4, window_bounds = array<i64: 3, 128, 128>}, {pipeline_mode = #tpu.pipeline_mode<synchronous>, transform_indices = @transform_5, window_bounds = array<i64: 4, 128>}, {pipeline_mode = #tpu.pipeline_mode<synchronous>, transform_indices = @transform_6, window_bounds = array<i64: 2, 128>}, {transform_indices = @transform_7, window_bounds = array<i64: 1, 16>}]} {
    %c0 = arith.constant 0 : index
    %c0_0 = arith.constant 0 : index
    %0 = vector.load %arg1[%c0, %c0_0] : memref<16x128xf32, #tpu.memory_space<vmem>>, vector<16x128xf32>
    %c0_1 = arith.constant 0 : index
    %c0_2 = arith.constant 0 : index
    %1 = vector.load %arg2[%c0_1, %c0_2] : memref<2x128xf32, #tpu.memory_space<vmem>>, vector<1x128xf32>
    %2 = vector.broadcast %1 : vector<1x128xf32> to vector<16x128xf32>
    %3 = arith.mulf %0, %2 : vector<16x128xf32>
    %c1 = arith.constant 1 : index
    %c0_3 = arith.constant 0 : index
    %4 = vector.load %arg2[%c1, %c0_3] : memref<2x128xf32, #tpu.memory_space<vmem>>, vector<1x128xf32>
    %5 = vector.broadcast %4 : vector<1x128xf32> to vector<16x128xf32>
    %6 = arith.addf %3, %5 : vector<16x128xf32>
    %7 = vector.extract_strided_slice %6 {offsets = [0, 0], sizes = [16, 8], strides = [1, 1]} : vector<16x128xf32> to vector<16x8xf32>
    %8 = vector.extract_strided_slice %6 {offsets = [0, 8], sizes = [16, 8], strides = [1, 1]} : vector<16x128xf32> to vector<16x8xf32>
    %c1_4 = arith.constant 1 : index
    %c0_5 = arith.constant 0 : index
    %c0_6 = arith.constant 0 : index
    %9 = vector.load %arg3[%c1_4, %c0_5, %c0_6] : memref<16x8x8xf32, #tpu.memory_space<vmem>>, vector<1x8x8xf32>
    %10 = vector.shape_cast %9 : vector<1x8x8xf32> to vector<8x8xf32>
    %cst = arith.constant dense<0.000000e+00> : vector<16x8xf32>
    %11 = tpu.matmul %7, %10, %cst {dimension_numbers = #tpu.dot_dimension_numbers<[1], [0], [0], [1], [0, 0, 1, 1], [], []>} : vector<16x8xf32>, vector<8x8xf32>, vector<16x8xf32> -> vector<16x8xf32>
    %12 = arith.addf %8, %11 : vector<16x8xf32>
    %13 = vector.extract_strided_slice %6 {offsets = [0, 16], sizes = [16, 8], strides = [1, 1]} : vector<16x128xf32> to vector<16x8xf32>
    %c2 = arith.constant 2 : index
    %c0_7 = arith.constant 0 : index
    %c0_8 = arith.constant 0 : index
    %14 = vector.load %arg3[%c2, %c0_7, %c0_8] : memref<16x8x8xf32, #tpu.memory_space<vmem>>, vector<1x8x8xf32>
    %15 = vector.shape_cast %14 : vector<1x8x8xf32> to vector<8x8xf32>
    %cst_9 = arith.constant dense<0.000000e+00> : vector<16x8xf32>
    %16 = tpu.matmul %7, %15, %cst_9 {dimension_numbers = #tpu.dot_dimension_numbers<[1], [0], [0], [1], [0, 0, 1, 1], [], []>} : vector<16x8xf32>, vector<8x8xf32>, vector<16x8xf32> -> vector<16x8xf32>
    %17 = arith.addf %13, %16 : vector<16x8xf32>
    %18 = vector.extract_strided_slice %6 {offsets = [0, 24], sizes = [16, 8], strides = [1, 1]} : vector<16x128xf32> to vector<16x8xf32>
    %c3 = arith.constant 3 : index
    %c0_10 = arith.constant 0 : index
    %c0_11 = arith.constant 0 : index
    %19 = vector.load %arg3[%c3, %c0_10, %c0_11] : memref<16x8x8xf32, #tpu.memory_space<vmem>>, vector<1x8x8xf32>
    %20 = vector.shape_cast %19 : vector<1x8x8xf32> to vector<8x8xf32>
    %cst_12 = arith.constant dense<0.000000e+00> : vector<16x8xf32>
    %21 = tpu.matmul %12, %20, %cst_12 {dimension_numbers = #tpu.dot_dimension_numbers<[1], [0], [0], [1], [0, 0, 1, 1], [], []>} : vector<16x8xf32>, vector<8x8xf32>, vector<16x8xf32> -> vector<16x8xf32>
    %22 = arith.addf %18, %21 : vector<16x8xf32>
    %23 = vector.extract_strided_slice %6 {offsets = [0, 32], sizes = [16, 8], strides = [1, 1]} : vector<16x128xf32> to vector<16x8xf32>
    %c4 = arith.constant 4 : index
    %c0_13 = arith.constant 0 : index
    %c0_14 = arith.constant 0 : index
    %24 = vector.load %arg3[%c4, %c0_13, %c0_14] : memref<16x8x8xf32, #tpu.memory_space<vmem>>, vector<1x8x8xf32>
    %25 = vector.shape_cast %24 : vector<1x8x8xf32> to vector<8x8xf32>
    %cst_15 = arith.constant dense<0.000000e+00> : vector<16x8xf32>
    %26 = tpu.matmul %12, %25, %cst_15 {dimension_numbers = #tpu.dot_dimension_numbers<[1], [0], [0], [1], [0, 0, 1, 1], [], []>} : vector<16x8xf32>, vector<8x8xf32>, vector<16x8xf32> -> vector<16x8xf32>
    %27 = arith.addf %23, %26 : vector<16x8xf32>
    %28 = vector.extract_strided_slice %6 {offsets = [0, 40], sizes = [16, 8], strides = [1, 1]} : vector<16x128xf32> to vector<16x8xf32>
    %c5 = arith.constant 5 : index
    %c0_16 = arith.constant 0 : index
    %c0_17 = arith.constant 0 : index
    %29 = vector.load %arg3[%c5, %c0_16, %c0_17] : memref<16x8x8xf32, #tpu.memory_space<vmem>>, vector<1x8x8xf32>
    %30 = vector.shape_cast %29 : vector<1x8x8xf32> to vector<8x8xf32>
    %cst_18 = arith.constant dense<0.000000e+00> : vector<16x8xf32>
    %31 = tpu.matmul %17, %30, %cst_18 {dimension_numbers = #tpu.dot_dimension_numbers<[1], [0], [0], [1], [0, 0, 1, 1], [], []>} : vector<16x8xf32>, vector<8x8xf32>, vector<16x8xf32> -> vector<16x8xf32>
    %32 = arith.addf %28, %31 : vector<16x8xf32>
    %33 = vector.extract_strided_slice %6 {offsets = [0, 48], sizes = [16, 8], strides = [1, 1]} : vector<16x128xf32> to vector<16x8xf32>
    %c6 = arith.constant 6 : index
    %c0_19 = arith.constant 0 : index
    %c0_20 = arith.constant 0 : index
    %34 = vector.load %arg3[%c6, %c0_19, %c0_20] : memref<16x8x8xf32, #tpu.memory_space<vmem>>, vector<1x8x8xf32>
    %35 = vector.shape_cast %34 : vector<1x8x8xf32> to vector<8x8xf32>
    %cst_21 = arith.constant dense<0.000000e+00> : vector<16x8xf32>
    %36 = tpu.matmul %17, %35, %cst_21 {dimension_numbers = #tpu.dot_dimension_numbers<[1], [0], [0], [1], [0, 0, 1, 1], [], []>} : vector<16x8xf32>, vector<8x8xf32>, vector<16x8xf32> -> vector<16x8xf32>
    %37 = arith.addf %33, %36 : vector<16x8xf32>
    %38 = vector.extract_strided_slice %6 {offsets = [0, 56], sizes = [16, 8], strides = [1, 1]} : vector<16x128xf32> to vector<16x8xf32>
    %c7 = arith.constant 7 : index
    %c0_22 = arith.constant 0 : index
    %c0_23 = arith.constant 0 : index
    %39 = vector.load %arg3[%c7, %c0_22, %c0_23] : memref<16x8x8xf32, #tpu.memory_space<vmem>>, vector<1x8x8xf32>
    %40 = vector.shape_cast %39 : vector<1x8x8xf32> to vector<8x8xf32>
    %cst_24 = arith.constant dense<0.000000e+00> : vector<16x8xf32>
    %41 = tpu.matmul %22, %40, %cst_24 {dimension_numbers = #tpu.dot_dimension_numbers<[1], [0], [0], [1], [0, 0, 1, 1], [], []>} : vector<16x8xf32>, vector<8x8xf32>, vector<16x8xf32> -> vector<16x8xf32>
    %42 = arith.addf %38, %41 : vector<16x8xf32>
    %43 = vector.extract_strided_slice %6 {offsets = [0, 64], sizes = [16, 8], strides = [1, 1]} : vector<16x128xf32> to vector<16x8xf32>
    %c8 = arith.constant 8 : index
    %c0_25 = arith.constant 0 : index
    %c0_26 = arith.constant 0 : index
    %44 = vector.load %arg3[%c8, %c0_25, %c0_26] : memref<16x8x8xf32, #tpu.memory_space<vmem>>, vector<1x8x8xf32>
    %45 = vector.shape_cast %44 : vector<1x8x8xf32> to vector<8x8xf32>
    %cst_27 = arith.constant dense<0.000000e+00> : vector<16x8xf32>
    %46 = tpu.matmul %22, %45, %cst_27 {dimension_numbers = #tpu.dot_dimension_numbers<[1], [0], [0], [1], [0, 0, 1, 1], [], []>} : vector<16x8xf32>, vector<8x8xf32>, vector<16x8xf32> -> vector<16x8xf32>
    %47 = arith.addf %43, %46 : vector<16x8xf32>
    %48 = vector.extract_strided_slice %6 {offsets = [0, 72], sizes = [16, 8], strides = [1, 1]} : vector<16x128xf32> to vector<16x8xf32>
    %c9 = arith.constant 9 : index
    %c0_28 = arith.constant 0 : index
    %c0_29 = arith.constant 0 : index
    %49 = vector.load %arg3[%c9, %c0_28, %c0_29] : memref<16x8x8xf32, #tpu.memory_space<vmem>>, vector<1x8x8xf32>
    %50 = vector.shape_cast %49 : vector<1x8x8xf32> to vector<8x8xf32>
    %cst_30 = arith.constant dense<0.000000e+00> : vector<16x8xf32>
    %51 = tpu.matmul %27, %50, %cst_30 {dimension_numbers = #tpu.dot_dimension_numbers<[1], [0], [0], [1], [0, 0, 1, 1], [], []>} : vector<16x8xf32>, vector<8x8xf32>, vector<16x8xf32> -> vector<16x8xf32>
    %52 = arith.addf %48, %51 : vector<16x8xf32>
    %53 = vector.extract_strided_slice %6 {offsets = [0, 80], sizes = [16, 8], strides = [1, 1]} : vector<16x128xf32> to vector<16x8xf32>
    %c10 = arith.constant 10 : index
    %c0_31 = arith.constant 0 : index
    %c0_32 = arith.constant 0 : index
    %54 = vector.load %arg3[%c10, %c0_31, %c0_32] : memref<16x8x8xf32, #tpu.memory_space<vmem>>, vector<1x8x8xf32>
    %55 = vector.shape_cast %54 : vector<1x8x8xf32> to vector<8x8xf32>
    %cst_33 = arith.constant dense<0.000000e+00> : vector<16x8xf32>
    %56 = tpu.matmul %27, %55, %cst_33 {dimension_numbers = #tpu.dot_dimension_numbers<[1], [0], [0], [1], [0, 0, 1, 1], [], []>} : vector<16x8xf32>, vector<8x8xf32>, vector<16x8xf32> -> vector<16x8xf32>
    %57 = arith.addf %53, %56 : vector<16x8xf32>
    %58 = vector.extract_strided_slice %6 {offsets = [0, 88], sizes = [16, 8], strides = [1, 1]} : vector<16x128xf32> to vector<16x8xf32>
    %c11 = arith.constant 11 : index
    %c0_34 = arith.constant 0 : index
    %c0_35 = arith.constant 0 : index
    %59 = vector.load %arg3[%c11, %c0_34, %c0_35] : memref<16x8x8xf32, #tpu.memory_space<vmem>>, vector<1x8x8xf32>
    %60 = vector.shape_cast %59 : vector<1x8x8xf32> to vector<8x8xf32>
    %cst_36 = arith.constant dense<0.000000e+00> : vector<16x8xf32>
    %61 = tpu.matmul %32, %60, %cst_36 {dimension_numbers = #tpu.dot_dimension_numbers<[1], [0], [0], [1], [0, 0, 1, 1], [], []>} : vector<16x8xf32>, vector<8x8xf32>, vector<16x8xf32> -> vector<16x8xf32>
    %62 = arith.addf %58, %61 : vector<16x8xf32>
    %63 = vector.extract_strided_slice %6 {offsets = [0, 96], sizes = [16, 8], strides = [1, 1]} : vector<16x128xf32> to vector<16x8xf32>
    %c12 = arith.constant 12 : index
    %c0_37 = arith.constant 0 : index
    %c0_38 = arith.constant 0 : index
    %64 = vector.load %arg3[%c12, %c0_37, %c0_38] : memref<16x8x8xf32, #tpu.memory_space<vmem>>, vector<1x8x8xf32>
    %65 = vector.shape_cast %64 : vector<1x8x8xf32> to vector<8x8xf32>
    %cst_39 = arith.constant dense<0.000000e+00> : vector<16x8xf32>
    %66 = tpu.matmul %32, %65, %cst_39 {dimension_numbers = #tpu.dot_dimension_numbers<[1], [0], [0], [1], [0, 0, 1, 1], [], []>} : vector<16x8xf32>, vector<8x8xf32>, vector<16x8xf32> -> vector<16x8xf32>
    %67 = arith.addf %63, %66 : vector<16x8xf32>
    %68 = vector.extract_strided_slice %6 {offsets = [0, 104], sizes = [16, 8], strides = [1, 1]} : vector<16x128xf32> to vector<16x8xf32>
    %c13 = arith.constant 13 : index
    %c0_40 = arith.constant 0 : index
    %c0_41 = arith.constant 0 : index
    %69 = vector.load %arg3[%c13, %c0_40, %c0_41] : memref<16x8x8xf32, #tpu.memory_space<vmem>>, vector<1x8x8xf32>
    %70 = vector.shape_cast %69 : vector<1x8x8xf32> to vector<8x8xf32>
    %cst_42 = arith.constant dense<0.000000e+00> : vector<16x8xf32>
    %71 = tpu.matmul %37, %70, %cst_42 {dimension_numbers = #tpu.dot_dimension_numbers<[1], [0], [0], [1], [0, 0, 1, 1], [], []>} : vector<16x8xf32>, vector<8x8xf32>, vector<16x8xf32> -> vector<16x8xf32>
    %72 = arith.addf %68, %71 : vector<16x8xf32>
    %73 = vector.extract_strided_slice %6 {offsets = [0, 112], sizes = [16, 8], strides = [1, 1]} : vector<16x128xf32> to vector<16x8xf32>
    %c14 = arith.constant 14 : index
    %c0_43 = arith.constant 0 : index
    %c0_44 = arith.constant 0 : index
    %74 = vector.load %arg3[%c14, %c0_43, %c0_44] : memref<16x8x8xf32, #tpu.memory_space<vmem>>, vector<1x8x8xf32>
    %75 = vector.shape_cast %74 : vector<1x8x8xf32> to vector<8x8xf32>
    %cst_45 = arith.constant dense<0.000000e+00> : vector<16x8xf32>
    %76 = tpu.matmul %37, %75, %cst_45 {dimension_numbers = #tpu.dot_dimension_numbers<[1], [0], [0], [1], [0, 0, 1, 1], [], []>} : vector<16x8xf32>, vector<8x8xf32>, vector<16x8xf32> -> vector<16x8xf32>
    %77 = arith.addf %73, %76 : vector<16x8xf32>
    %78 = vector.extract_strided_slice %6 {offsets = [0, 120], sizes = [16, 8], strides = [1, 1]} : vector<16x128xf32> to vector<16x8xf32>
    %c15 = arith.constant 15 : index
    %c0_46 = arith.constant 0 : index
    %c0_47 = arith.constant 0 : index
    %79 = vector.load %arg3[%c15, %c0_46, %c0_47] : memref<16x8x8xf32, #tpu.memory_space<vmem>>, vector<1x8x8xf32>
    %80 = vector.shape_cast %79 : vector<1x8x8xf32> to vector<8x8xf32>
    %cst_48 = arith.constant dense<0.000000e+00> : vector<16x8xf32>
    %81 = tpu.matmul %42, %80, %cst_48 {dimension_numbers = #tpu.dot_dimension_numbers<[1], [0], [0], [1], [0, 0, 1, 1], [], []>} : vector<16x8xf32>, vector<8x8xf32>, vector<16x8xf32> -> vector<16x8xf32>
    %82 = arith.addf %78, %81 : vector<16x8xf32>
    %83 = tpu.concatenate %7, %12, %17, %22, %27, %32, %37, %42, %47, %52, %57, %62, %67, %72, %77, %82 in 1 : vector<16x8xf32>, vector<16x8xf32>, vector<16x8xf32>, vector<16x8xf32>, vector<16x8xf32>, vector<16x8xf32>, vector<16x8xf32>, vector<16x8xf32>, vector<16x8xf32>, vector<16x8xf32>, vector<16x8xf32>, vector<16x8xf32>, vector<16x8xf32>, vector<16x8xf32>, vector<16x8xf32>, vector<16x8xf32> -> vector<16x128xf32>
    %cst_49 = arith.constant 0.000000e+00 : f32
    %84 = vector.broadcast %cst_49 : f32 to vector<16x128xf32>
    %85 = arith.cmpf ogt, %83, %84 : vector<16x128xf32>
    %cst_50 = arith.constant 0.00999999977 : f32
    %86 = vector.broadcast %cst_50 : f32 to vector<16x128xf32>
    %87 = arith.mulf %86, %83 : vector<16x128xf32>
    %88 = arith.select %85, %83, %87 : vector<16x128xi1>, vector<16x128xf32>
    %c0_51 = arith.constant 0 : index
    %c0_52 = arith.constant 0 : index
    %89 = vector.load %arg4[%c0_51, %c0_52] : memref<128x128xf32, #tpu.memory_space<vmem>>, vector<128x128xf32>
    %cst_53 = arith.constant dense<0.000000e+00> : vector<16x128xf32>
    %90 = tpu.matmul %88, %89, %cst_53 {dimension_numbers = #tpu.dot_dimension_numbers<[1], [0], [0], [1], [0, 0, 1, 1], [], []>} : vector<16x128xf32>, vector<128x128xf32>, vector<16x128xf32> -> vector<16x128xf32>
    %c0_54 = arith.constant 0 : index
    %c0_55 = arith.constant 0 : index
    %91 = vector.load %arg6[%c0_54, %c0_55] : memref<4x128xf32, #tpu.memory_space<vmem>>, vector<1x128xf32>
    %92 = vector.broadcast %91 : vector<1x128xf32> to vector<16x128xf32>
    %93 = arith.addf %90, %92 : vector<16x128xf32>
    %cst_56 = arith.constant 0.000000e+00 : f32
    %94 = vector.broadcast %cst_56 : f32 to vector<16x128xf32>
    %95 = arith.cmpf ogt, %93, %94 : vector<16x128xf32>
    %cst_57 = arith.constant 0.00999999977 : f32
    %96 = vector.broadcast %cst_57 : f32 to vector<16x128xf32>
    %97 = arith.mulf %96, %93 : vector<16x128xf32>
    %98 = arith.select %95, %93, %97 : vector<16x128xi1>, vector<16x128xf32>
    %c0_58 = arith.constant 0 : index
    %c0_59 = arith.constant 0 : index
    %c0_60 = arith.constant 0 : index
    %99 = vector.load %arg5[%c0_58, %c0_59, %c0_60] : memref<3x128x128xf32, #tpu.memory_space<vmem>>, vector<1x128x128xf32>
    %100 = vector.shape_cast %99 : vector<1x128x128xf32> to vector<128x128xf32>
    %cst_61 = arith.constant dense<0.000000e+00> : vector<16x128xf32>
    %101 = tpu.matmul %98, %100, %cst_61 {dimension_numbers = #tpu.dot_dimension_numbers<[1], [0], [0], [1], [0, 0, 1, 1], [], []>} : vector<16x128xf32>, vector<128x128xf32>, vector<16x128xf32> -> vector<16x128xf32>
    %c1_62 = arith.constant 1 : index
    %c0_63 = arith.constant 0 : index
    %102 = vector.load %arg6[%c1_62, %c0_63] : memref<4x128xf32, #tpu.memory_space<vmem>>, vector<1x128xf32>
    %103 = vector.broadcast %102 : vector<1x128xf32> to vector<16x128xf32>
    %104 = arith.addf %101, %103 : vector<16x128xf32>
    %cst_64 = arith.constant 0.000000e+00 : f32
    %105 = vector.broadcast %cst_64 : f32 to vector<16x128xf32>
    %106 = arith.cmpf ogt, %104, %105 : vector<16x128xf32>
    %cst_65 = arith.constant 0.00999999977 : f32
    %107 = vector.broadcast %cst_65 : f32 to vector<16x128xf32>
    %108 = arith.mulf %107, %104 : vector<16x128xf32>
    %109 = arith.select %106, %104, %108 : vector<16x128xi1>, vector<16x128xf32>
    %c1_66 = arith.constant 1 : index
    %c0_67 = arith.constant 0 : index
    %c0_68 = arith.constant 0 : index
    %110 = vector.load %arg5[%c1_66, %c0_67, %c0_68] : memref<3x128x128xf32, #tpu.memory_space<vmem>>, vector<1x128x128xf32>
    %111 = vector.shape_cast %110 : vector<1x128x128xf32> to vector<128x128xf32>
    %cst_69 = arith.constant dense<0.000000e+00> : vector<16x128xf32>
    %112 = tpu.matmul %109, %111, %cst_69 {dimension_numbers = #tpu.dot_dimension_numbers<[1], [0], [0], [1], [0, 0, 1, 1], [], []>} : vector<16x128xf32>, vector<128x128xf32>, vector<16x128xf32> -> vector<16x128xf32>
    %c2_70 = arith.constant 2 : index
    %c0_71 = arith.constant 0 : index
    %113 = vector.load %arg6[%c2_70, %c0_71] : memref<4x128xf32, #tpu.memory_space<vmem>>, vector<1x128xf32>
    %114 = vector.broadcast %113 : vector<1x128xf32> to vector<16x128xf32>
    %115 = arith.addf %112, %114 : vector<16x128xf32>
    %cst_72 = arith.constant 0.000000e+00 : f32
    %116 = vector.broadcast %cst_72 : f32 to vector<16x128xf32>
    %117 = arith.cmpf ogt, %115, %116 : vector<16x128xf32>
    %cst_73 = arith.constant 0.00999999977 : f32
    %118 = vector.broadcast %cst_73 : f32 to vector<16x128xf32>
    %119 = arith.mulf %118, %115 : vector<16x128xf32>
    %120 = arith.select %117, %115, %119 : vector<16x128xi1>, vector<16x128xf32>
    %c2_74 = arith.constant 2 : index
    %c0_75 = arith.constant 0 : index
    %c0_76 = arith.constant 0 : index
    %121 = vector.load %arg5[%c2_74, %c0_75, %c0_76] : memref<3x128x128xf32, #tpu.memory_space<vmem>>, vector<1x128x128xf32>
    %122 = vector.shape_cast %121 : vector<1x128x128xf32> to vector<128x128xf32>
    %cst_77 = arith.constant dense<0.000000e+00> : vector<16x128xf32>
    %123 = tpu.matmul %120, %122, %cst_77 {dimension_numbers = #tpu.dot_dimension_numbers<[1], [0], [0], [1], [0, 0, 1, 1], [], []>} : vector<16x128xf32>, vector<128x128xf32>, vector<16x128xf32> -> vector<16x128xf32>
    %c3_78 = arith.constant 3 : index
    %c0_79 = arith.constant 0 : index
    %124 = vector.load %arg6[%c3_78, %c0_79] : memref<4x128xf32, #tpu.memory_space<vmem>>, vector<1x128xf32>
    %125 = vector.broadcast %124 : vector<1x128xf32> to vector<16x128xf32>
    %126 = arith.addf %123, %125 : vector<16x128xf32>
    %cst_80 = arith.constant 0.000000e+00 : f32
    %127 = vector.broadcast %cst_80 : f32 to vector<16x128xf32>
    %128 = arith.cmpf ogt, %126, %127 : vector<16x128xf32>
    %cst_81 = arith.constant 0.00999999977 : f32
    %129 = vector.broadcast %cst_81 : f32 to vector<16x128xf32>
    %130 = arith.mulf %129, %126 : vector<16x128xf32>
    %131 = arith.select %128, %126, %130 : vector<16x128xi1>, vector<16x128xf32>
    %c0_82 = arith.constant 0 : index
    %c0_83 = arith.constant 0 : index
    %132 = vector.load %arg7[%c0_82, %c0_83] : memref<2x128xf32, #tpu.memory_space<vmem>>, vector<1x128xf32>
    %cst_84 = arith.constant dense<0.000000e+00> : vector<1x16xf32>
    %133 = tpu.matmul %132, %131, %cst_84 {dimension_numbers = #tpu.dot_dimension_numbers<[1], [1], [0], [0], [0, 0, 1, 0], [], []>} : vector<1x128xf32>, vector<16x128xf32>, vector<1x16xf32> -> vector<1x16xf32>
    %c1_85 = arith.constant 1 : index
    %c0_86 = arith.constant 0 : index
    %134 = vector.load %arg7[%c1_85, %c0_86] : memref<2x128xf32, #tpu.memory_space<vmem>>, vector<1x1xf32>
    %135 = vector.broadcast %134 : vector<1x1xf32> to vector<1x16xf32>
    %136 = arith.addf %133, %135 : vector<1x16xf32>
    %c0_87 = arith.constant 0 : index
    %c0_88 = arith.constant 0 : index
    %137 = vector.load %arg8[%c0_87, %c0_88] : memref<1x16xf32, #tpu.memory_space<vmem>>, vector<1x16xf32>
    tpu.vector_store %arg8[%c0_87, %c0_88], %136 {strides = array<i32>} : memref<1x16xf32, #tpu.memory_space<vmem>>, vector<1x16xf32>,
    return
  }
  func.func @transform_0(%arg0: i32) -> (i32, i32) {
    %c0_i32 = arith.constant 0 : i32
    %c0_i32_0 = arith.constant 0 : i32
    return %arg0, %c0_i32 : i32, i32
  }
  func.func @transform_1(%arg0: i32) -> (i32, i32) {
    %c0_i32 = arith.constant 0 : i32
    %c0_i32_0 = arith.constant 0 : i32
    %c0_i32_1 = arith.constant 0 : i32
    return %c0_i32, %c0_i32_0 : i32, i32
  }
  func.func @transform_2(%arg0: i32) -> (i32, i32, i32) {
    %c0_i32 = arith.constant 0 : i32
    %c0_i32_0 = arith.constant 0 : i32
    %c0_i32_1 = arith.constant 0 : i32
    %c0_i32_2 = arith.constant 0 : i32
    return %c0_i32, %c0_i32_0, %c0_i32_1 : i32, i32, i32
  }
  func.func @transform_3(%arg0: i32) -> (i32, i32) {
    %c0_i32 = arith.constant 0 : i32
    %c0_i32_0 = arith.constant 0 : i32
    %c0_i32_1 = arith.constant 0 : i32
    return %c0_i32, %c0_i32_0 : i32, i32
  }
  func.func @transform_4(%arg0: i32) -> (i32, i32, i32) {
    %c0_i32 = arith.constant 0 : i32
    %c0_i32_0 = arith.constant 0 : i32
    %c0_i32_1 = arith.constant 0 : i32
    %c0_i32_2 = arith.constant 0 : i32
    return %c0_i32, %c0_i32_0, %c0_i32_1 : i32, i32, i32
  }
  func.func @transform_5(%arg0: i32) -> (i32, i32) {
    %c0_i32 = arith.constant 0 : i32
    %c0_i32_0 = arith.constant 0 : i32
    %c0_i32_1 = arith.constant 0 : i32
    return %c0_i32, %c0_i32_0 : i32, i32
  }
  func.func @transform_6(%arg0: i32) -> (i32, i32) {
    %c0_i32 = arith.constant 0 : i32
    %c0_i32_0 = arith.constant 0 : i32
    %c0_i32_1 = arith.constant 0 : i32
    return %c0_i32, %c0_i32_0 : i32, i32
  }
  func.func @transform_7(%arg0: i32) -> (i32, i32) {
    %c0_i32 = arith.constant 0 : i32
    %c0_i32_0 = arith.constant 0 : i32
    return %arg0, %c0_i32 : i32, i32
  }
}

</mosaic_0001>

<llo_original>
// kernel: tpu_custom_call.1
$region0: #{tpu_custom_call.1}
  #allocation0 [shape = 'u32[]', space=smem, size = 0x4, offset = 0x4, fixed_abs, tag = 'smem constant byte address 0x4 - core index']
  #allocation1 [shape = 'u32[144,128]{1,0:T(1,128)}', space=vmem, size = 0x12000, scoped, tag = 'internal scratch']
  %s0 = inlined_call_operand.vmem [shape: f32[16,128], index: 0, kind: input, shape index: {}]
  %s1 = inlined_call_operand.vmem [shape: f32[2,128], index: 1, kind: input, shape index: {}]
  %s2 = inlined_call_operand.vmem [shape: f32[16,8,8], index: 2, kind: input, shape index: {}]
  %s3 = inlined_call_operand.vmem [shape: f32[128,128], index: 3, kind: input, shape index: {}]
  %s4 = inlined_call_operand.hbm [shape: f32[3,128,128], index: 4, kind: input, shape index: {}]
  %s5 = inlined_call_operand.vmem [shape: f32[4,128], index: 5, kind: input, shape index: {}]
  %s6 = inlined_call_operand.vmem [shape: f32[2,128], index: 6, kind: input, shape index: {}]
  %s7 = inlined_call_operand.hbm [shape: f32[1,16], index: 7, kind: output, shape index: {}]
  %s8 = sld [smem:[#allocation0]]
  $region42: #{tpu_custom_call.1} parent=0
    _
  %s10 = ssub.s32 1, %s8
  %s11 = scalar_select 0, %s10, %s8
  $region1: #{tpu_custom_call.1} parent=0
    #allocation2 [shape = 'u8[196608]{0}', space=vmem, size = 0x30000, scoped, tag = 'input window, operand 4, single buffered']
    #allocation3 [shape = 's32[1]{0}', space=sflag, size = 0x4, scoped, tag = 'scoped memory for tpu_custom_call.1']
    #allocation4 [shape = 's32[1]{0}', space=sflag, size = 0x4, scoped, tag = 'scoped memory for tpu_custom_call.1']
    #allocation5 [shape = 'u8[512]{0}', space=vmem, size = 0x400, scoped, tag = 'output window, operand 0, single buffered']
    %12 = vsyncpa [#allocation3], 0
    %13 = vsyncpa [#allocation4], 0
    // Predicated region
    $region2: #{tpu_custom_call.1} parent=1 // pred_check
      _
    $region3: #{tpu_custom_call.1} parent=1 // pred_check_branch
      %15 = sbr.rel (0) target = $region5
    $region4: #{tpu_custom_call.1} parent=1 // pred_region
      _
    $region5: #{tpu_custom_call.1} parent=1 // pred_fallthru
      _
    // Predicated region
    $region6: #{tpu_custom_call.1} parent=1 // pred_check
      _
    $region7: #{tpu_custom_call.1} parent=1 // pred_check_branch
      %17 = sbr.rel (0) target = $region9
    $region8: #{tpu_custom_call.1} parent=1 // pred_region
      _
    $region9: #{tpu_custom_call.1} parent=1 // pred_fallthru
      _
    // Predicated region
    $region10: #{tpu_custom_call.1} parent=1 // pred_check
      _
    $region11: #{tpu_custom_call.1} parent=1 // pred_check_branch
      %19 = sbr.rel (0) target = $region13
    $region12: #{tpu_custom_call.1} parent=1 // pred_region
      _
    $region13: #{tpu_custom_call.1} parent=1 // pred_fallthru
      _
    // Predicated region
    $region14: #{tpu_custom_call.1} parent=1 // pred_check
      _
    $region15: #{tpu_custom_call.1} parent=1 // pred_check_branch
      %21 = sbr.rel (0) target = $region17
    $region16: #{tpu_custom_call.1} parent=1 // pred_region
      _
    $region17: #{tpu_custom_call.1} parent=1 // pred_fallthru
      _
    // Predicated region
    $region18: #{tpu_custom_call.1} parent=1 // pred_check
      _
    $region19: #{tpu_custom_call.1} parent=1 // pred_check_branch
      %23 = sbr.rel (0) target = $region21
    $region20: #{tpu_custom_call.1} parent=1 // pred_region
      %s25 = ssub.s32 6144, 6144
      %26 = vsyncadd [#allocation3], %s25
      %s27 = sshll.u32 [#allocation2], 4
      %s28 = int_to_ptr.vmem [resolvable:$true] %s27
      %33 = dma.hbm_to_vmem [thread:$0]  %s4, 6144, %s28, [#allocation3], 128, 128, 8
    $region21: #{tpu_custom_call.1} parent=1 // pred_fallthru
      _
    // Predicated region
    $region22: #{tpu_custom_call.1} parent=1 // pred_check
      _
    $region23: #{tpu_custom_call.1} parent=1 // pred_check_branch
      %35 = sbr.rel (0) target = $region25
    $region24: #{tpu_custom_call.1} parent=1 // pred_region
      _
    $region25: #{tpu_custom_call.1} parent=1 // pred_fallthru
      _
    // Predicated region
    $region26: #{tpu_custom_call.1} parent=1 // pred_check
      _
    $region27: #{tpu_custom_call.1} parent=1 // pred_check_branch
      %37 = sbr.rel (0) target = $region29
    $region28: #{tpu_custom_call.1} parent=1 // pred_region
      _
    $region29: #{tpu_custom_call.1} parent=1 // pred_fallthru
      _
    // Predicated region
    $region30: #{tpu_custom_call.1} parent=1 // pred_check
      _
    $region31: #{tpu_custom_call.1} parent=1 // pred_check_branch
      %39 = sbr.rel (0) target = $region33
    $region32: #{tpu_custom_call.1} parent=1 // pred_region
      %40 = dma.done [#allocation3], 6144
    $region33: #{tpu_custom_call.1} parent=1 // pred_fallthru
      _
    %v41 = vld [vmem:[%s0] sm:$0xff]
    %v42 = vld [vmem:[%s0 + $0x8] sm:$0xff]
    %v43 = vld [vmem:[%s1] sm:$0x1]
    %v44 = vlaneseq
    %v45 = vshrl.u32 %v44, 7
    %v46 = vsub.s32 0, %v45
    %v47 = vrot.slane %v43, %v46
    %v48 = vmul.f32 %v41, %v47
    %v49 = vmul.f32 %v42, %v47
    %v50 = vld [vmem:[%s1 + $0x1] sm:$0x1]
    %v51 = vlaneseq
    %v52 = vshrl.u32 %v51, 7
    %v53 = vsub.s32 0, %v52
    %v54 = vrot.slane %v50, %v53
    %v55 = vadd.f32 %v48, %v54
    %v56 = vadd.f32 %v49, %v54
    %s57 = scalar_lea.vmem %s2, 8
    %v58 = vld [vmem:[%s57] sm:$0xff]
    %vm59 = vcmask 64512
    %v61 = vsel %vm59, %v55, 0
    %v64 = vsel %vm59, %v56, 0
    %66 = vmatprep.subr.mxu0 0.0
    %67 = vmatpush1.msra.mxu0 %v58
    %68 = vmatprep.subr.mxu0 0.0
    %69 = vmatpush1.msra.mxu0 0.0
    %70 = vmatprep.subr.mxu0 0.0
    %71 = vmatpush1.msra.mxu0 0.0
    %72 = vmatprep.subr.mxu0 0.0
    %73 = vmatpush1.msra.mxu0 0.0
    %74 = vmatprep.subr.mxu0 0.0
    %75 = vmatpush1.msra.mxu0 0.0
    %76 = vmatprep.subr.mxu0 0.0
    %77 = vmatpush1.msra.mxu0 0.0
    %78 = vmatprep.subr.mxu0 0.0
    %79 = vmatpush1.msra.mxu0 0.0
    %80 = vmatprep.subr.mxu0 0.0
    %81 = vmatpush1.msra.mxu0 0.0
    %82 = vmatprep.subr.mxu0 0.0
    %83 = vmatpush1.msra.mxu0 0.0
    %84 = vmatprep.subr.mxu0 0.0
    %85 = vmatpush1.msra.mxu0 0.0
    %86 = vmatprep.subr.mxu0 0.0
    %87 = vmatpush1.msra.mxu0 0.0
    %88 = vmatprep.subr.mxu0 0.0
    %89 = vmatpush1.msra.mxu0 0.0
    %90 = vmatprep.subr.mxu0 0.0
    %91 = vmatpush1.msra.mxu0 0.0
    %92 = vmatprep.subr.mxu0 0.0
    %93 = vmatpush1.msra.mxu0 0.0
    %94 = vmatprep.subr.mxu0 0.0
    %95 = vmatpush1.msra.mxu0 0.0
    %96 = vmatprep.subr.mxu0 0.0
    %97 = vmatpush1.msra.mxu0 0.0
    %98 = vmatprep.subr.mxu0 0.0
    %99 = vmatpush1.msra.mxu0 0.0
    %100 = vmatprep.subr.mxu0 0.0
    %101 = vmatpush1.msra.mxu0 0.0
    %102 = vmatprep.subr.mxu0 0.0
    %103 = vmatpush1.msra.mxu0 0.0
    %104 = vmatprep.subr.mxu0 0.0
    %105 = vmatpush1.msra.mxu0 0.0
    %106 = vmatprep.subr.mxu0 0.0
    %107 = vmatpush1.msra.mxu0 0.0
    %108 = vmatprep.subr.mxu0 0.0
    %109 = vmatpush1.msra.mxu0 0.0
    %110 = vmatprep.subr.mxu0 0.0
    %111 = vmatpush1.msra.mxu0 0.0
    %112 = vmatprep.subr.mxu0 0.0
    %113 = vmatpush1.msra.mxu0 0.0
    %114 = vmatprep.subr.mxu0 0.0
    %115 = vmatpush1.msra.mxu0 0.0
    %116 = vmatprep.subr.mxu0 0.0
    %117 = vmatpush1.msra.mxu0 0.0
    %118 = vmatprep.subr.mxu0 0.0
    %119 = vmatpush1.msra.mxu0 0.0
    %120 = vmatprep.subr.mxu0 0.0
    %121 = vmatpush1.msra.mxu0 0.0
    %122 = vmatprep.subr.mxu0 0.0
    %123 = vmatpush1.msra.mxu0 0.0
    %124 = vmatprep.subr.mxu0 0.0
    %125 = vmatpush1.msra.mxu0 0.0
    %126 = vmatprep.subr.mxu0 0.0
    %127 = vmatpush1.msra.mxu0 0.0
    %128 = vmatprep.subr.mxu0 0.0
    %129 = vmatpush1.msra.mxu0 0.0
    %130 = vmatprep.mubr.f32.mxu0 0.0
    %131 = vmatmul.mubr.f32.gmra.mrb[0].mxu0 %v61
    %v132 = vpop.f32.mrb[0].mxu0
    %v133 = vadd.f32 0.0, %v132
    %v134 = vpop.f32.mrb[0].mxu0
    %135 = vmatprep.mubr.f32.mxu0 0.0
    %136 = vmatmul.mubr.f32.gmra.mrb[0].mxu0 %v64
    %v137 = vpop.f32.mrb[0].mxu0
    %v138 = vadd.f32 0.0, %v137
    %v139 = vpop.f32.mrb[0].mxu0
    %140 = vdwg.mxu0
    %143 = vrot.lane.b32.xlu0 %v133, 8
    %v144 = vpop.permute.xlu0 %143
    %145 = vrot.lane.b32.xlu0 %v138, 8
    %v146 = vpop.permute.xlu0 %145
    %v149 = vadd.f32 %v55, %v144
    %v150 = vadd.f32 %v56, %v146
    %s151 = scalar_lea.vmem %s2, 16
    %v152 = vld [vmem:[%s151] sm:$0xff]
    %153 = vmatprep.subr.mxu0 0.0
    %154 = vmatpush1.msra.mxu0 %v152
    %155 = vmatprep.subr.mxu0 0.0
    %156 = vmatpush1.msra.mxu0 0.0
    %157 = vmatprep.subr.mxu0 0.0
    %158 = vmatpush1.msra.mxu0 0.0
    %159 = vmatprep.subr.mxu0 0.0
    %160 = vmatpush1.msra.mxu0 0.0
    %161 = vmatprep.subr.mxu0 0.0
    %162 = vmatpush1.msra.mxu0 0.0
    %163 = vmatprep.subr.mxu0 0.0
    %164 = vmatpush1.msra.mxu0 0.0
    %165 = vmatprep.subr.mxu0 0.0
    %166 = vmatpush1.msra.mxu0 0.0
    %167 = vmatprep.subr.mxu0 0.0
    %168 = vmatpush1.msra.mxu0 0.0
    %169 = vmatprep.subr.mxu0 0.0
    %170 = vmatpush1.msra.mxu0 0.0
    %171 = vmatprep.subr.mxu0 0.0
    %172 = vmatpush1.msra.mxu0 0.0
    %173 = vmatprep.subr.mxu0 0.0
    %174 = vmatpush1.msra.mxu0 0.0
    %175 = vmatprep.subr.mxu0 0.0
    %176 = vmatpush1.msra.mxu0 0.0
    %177 = vmatprep.subr.mxu0 0.0
    %178 = vmatpush1.msra.mxu0 0.0
    %179 = vmatprep.subr.mxu0 0.0
    %180 = vmatpush1.msra.mxu0 0.0
    %181 = vmatprep.subr.mxu0 0.0
    %182 = vmatpush1.msra.mxu0 0.0
    %183 = vmatprep.subr.mxu0 0.0
    %184 = vmatpush1.msra.mxu0 0.0
    %185 = vmatprep.subr.mxu0 0.0
    %186 = vmatpush1.msra.mxu0 0.0
    %187 = vmatprep.subr.mxu0 0.0
    %188 = vmatpush1.msra.mxu0 0.0
    %189 = vmatprep.subr.mxu0 0.0
    %190 = vmatpush1.msra.mxu0 0.0
    %191 = vmatprep.subr.mxu0 0.0
    %192 = vmatpush1.msra.mxu0 0.0
    %193 = vmatprep.subr.mxu0 0.0
    %194 = vmatpush1.msra.mxu0 0.0
    %195 = vmatprep.subr.mxu0 0.0
    %196 = vmatpush1.msra.mxu0 0.0
    %197 = vmatprep.subr.mxu0 0.0
    %198 = vmatpush1.msra.mxu0 0.0
    %199 = vmatprep.subr.mxu0 0.0
    %200 = vmatpush1.msra.mxu0 0.0
    %201 = vmatprep.subr.mxu0 0.0
    %202 = vmatpush1.msra.mxu0 0.0
    %203 = vmatprep.subr.mxu0 0.0
    %204 = vmatpush1.msra.mxu0 0.0
    %205 = vmatprep.subr.mxu0 0.0
    %206 = vmatpush1.msra.mxu0 0.0
    %207 = vmatprep.subr.mxu0 0.0
    %208 = vmatpush1.msra.mxu0 0.0
    %209 = vmatprep.subr.mxu0 0.0
    %210 = vmatpush1.msra.mxu0 0.0
    %211 = vmatprep.subr.mxu0 0.0
    %212 = vmatpush1.msra.mxu0 0.0
    %213 = vmatprep.subr.mxu0 0.0
    %214 = vmatpush1.msra.mxu0 0.0
    %215 = vmatprep.subr.mxu0 0.0
    %216 = vmatpush1.msra.mxu0 0.0
    %217 = vmatprep.mubr.f32.mxu0 0.0
    %218 = vmatmul.mubr.f32.gmra.mrb[0].mxu0 %v61
    %v219 = vpop.f32.mrb[0].mxu0
    %v220 = vadd.f32 0.0, %v219
    %v221 = vpop.f32.mrb[0].mxu0
    %222 = vmatprep.mubr.f32.mxu0 0.0
    %223 = vmatmul.mubr.f32.gmra.mrb[0].mxu0 %v64
    %v224 = vpop.f32.mrb[0].mxu0
    %v225 = vadd.f32 0.0, %v224
    %v226 = vpop.f32.mrb[0].mxu0
    %227 = vdwg.mxu0
    %230 = vrot.lane.b32.xlu0 %v220, 16
    %v231 = vpop.permute.xlu0 %230
    %232 = vrot.lane.b32.xlu0 %v225, 16
    %v233 = vpop.permute.xlu0 %232
    %v236 = vadd.f32 %v55, %v231
    %v237 = vadd.f32 %v56, %v233
    %s238 = scalar_lea.vmem %s2, 24
    %v239 = vld [vmem:[%s238] sm:$0xff]
    %242 = vrot.lane.b32.xlu0 %v149, 120
    %v243 = vpop.permute.xlu0 %242
    %244 = vrot.lane.b32.xlu0 %v150, 120
    %v245 = vpop.permute.xlu0 %244
    %v246 = vsel %vm59, %v243, 0
    %v248 = vsel %vm59, %v245, 0
    %250 = vmatprep.subr.mxu0 0.0
    %251 = vmatpush1.msra.mxu0 %v239
    %252 = vmatprep.subr.mxu0 0.0
    %253 = vmatpush1.msra.mxu0 0.0
    %254 = vmatprep.subr.mxu0 0.0
    %255 = vmatpush1.msra.mxu0 0.0
    %256 = vmatprep.subr.mxu0 0.0
    %257 = vmatpush1.msra.mxu0 0.0
    %258 = vmatprep.subr.mxu0 0.0
    %259 = vmatpush1.msra.mxu0 0.0
    %260 = vmatprep.subr.mxu0 0.0
    %261 = vmatpush1.msra.mxu0 0.0
    %262 = vmatprep.subr.mxu0 0.0
    %263 = vmatpush1.msra.mxu0 0.0
    %264 = vmatprep.subr.mxu0 0.0
    %265 = vmatpush1.msra.mxu0 0.0
    %266 = vmatprep.subr.mxu0 0.0
    %267 = vmatpush1.msra.mxu0 0.0
    %268 = vmatprep.subr.mxu0 0.0
    %269 = vmatpush1.msra.mxu0 0.0
    %270 = vmatprep.subr.mxu0 0.0
    %271 = vmatpush1.msra.mxu0 0.0
    %272 = vmatprep.subr.mxu0 0.0
    %273 = vmatpush1.msra.mxu0 0.0
    %274 = vmatprep.subr.mxu0 0.0
    %275 = vmatpush1.msra.mxu0 0.0
    %276 = vmatprep.subr.mxu0 0.0
    %277 = vmatpush1.msra.mxu0 0.0
    %278 = vmatprep.subr.mxu0 0.0
    %279 = vmatpush1.msra.mxu0 0.0
    %280 = vmatprep.subr.mxu0 0.0
    %281 = vmatpush1.msra.mxu0 0.0
    %282 = vmatprep.subr.mxu0 0.0
    %283 = vmatpush1.msra.mxu0 0.0
    %284 = vmatprep.subr.mxu0 0.0
    %285 = vmatpush1.msra.mxu0 0.0
    %286 = vmatprep.subr.mxu0 0.0
    %287 = vmatpush1.msra.mxu0 0.0
    %288 = vmatprep.subr.mxu0 0.0
    %289 = vmatpush1.msra.mxu0 0.0
    %290 = vmatprep.subr.mxu0 0.0
    %291 = vmatpush1.msra.mxu0 0.0
    %292 = vmatprep.subr.mxu0 0.0
    %293 = vmatpush1.msra.mxu0 0.0
    %294 = vmatprep.subr.mxu0 0.0
    %295 = vmatpush1.msra.mxu0 0.0
    %296 = vmatprep.subr.mxu0 0.0
    %297 = vmatpush1.msra.mxu0 0.0
    %298 = vmatprep.subr.mxu0 0.0
    %299 = vmatpush1.msra.mxu0 0.0
    %300 = vmatprep.subr.mxu0 0.0
    %301 = vmatpush1.msra.mxu0 0.0
    %302 = vmatprep.subr.mxu0 0.0
    %303 = vmatpush1.msra.mxu0 0.0
    %304 = vmatprep.subr.mxu0 0.0
    %305 = vmatpush1.msra.mxu0 0.0
    %306 = vmatprep.subr.mxu0 0.0
    %307 = vmatpush1.msra.mxu0 0.0
    %308 = vmatprep.subr.mxu0 0.0
    %309 = vmatpush1.msra.mxu0 0.0
    %310 = vmatprep.subr.mxu0 0.0
    %311 = vmatpush1.msra.mxu0 0.0
    %312 = vmatprep.subr.mxu0 0.0
    %313 = vmatpush1.msra.mxu0 0.0
    %314 = vmatprep.mubr.f32.mxu0 0.0
    %315 = vmatmul.mubr.f32.gmra.mrb[0].mxu0 %v246
    %v316 = vpop.f32.mrb[0].mxu0
    %v317 = vadd.f32 0.0, %v316
    %v318 = vpop.f32.mrb[0].mxu0
    %319 = vmatprep.mubr.f32.mxu0 0.0
    %320 = vmatmul.mubr.f32.gmra.mrb[0].mxu0 %v248
    %v321 = vpop.f32.mrb[0].mxu0
    %v322 = vadd.f32 0.0, %v321
    %v323 = vpop.f32.mrb[0].mxu0
    %324 = vdwg.mxu0
    %327 = vrot.lane.b32.xlu0 %v317, 24
    %v328 = vpop.permute.xlu0 %327
    %329 = vrot.lane.b32.xlu0 %v322, 24
    %v330 = vpop.permute.xlu0 %329
    %v333 = vadd.f32 %v55, %v328
    %v334 = vadd.f32 %v56, %v330
    %s335 = scalar_lea.vmem %s2, 32
    %v336 = vld [vmem:[%s335] sm:$0xff]
    %337 = vmatprep.subr.mxu0 0.0
    %338 = vmatpush1.msra.mxu0 %v336
    %339 = vmatprep.subr.mxu0 0.0
    %340 = vmatpush1.msra.mxu0 0.0
    %341 = vmatprep.subr.mxu0 0.0
    %342 = vmatpush1.msra.mxu0 0.0
    %343 = vmatprep.subr.mxu0 0.0
    %344 = vmatpush1.msra.mxu0 0.0
    %345 = vmatprep.subr.mxu0 0.0
    %346 = vmatpush1.msra.mxu0 0.0
    %347 = vmatprep.subr.mxu0 0.0
    %348 = vmatpush1.msra.mxu0 0.0
    %349 = vmatprep.subr.mxu0 0.0
    %350 = vmatpush1.msra.mxu0 0.0
    %351 = vmatprep.subr.mxu0 0.0
    %352 = vmatpush1.msra.mxu0 0.0
    %353 = vmatprep.subr.mxu0 0.0
    %354 = vmatpush1.msra.mxu0 0.0
    %355 = vmatprep.subr.mxu0 0.0
    %356 = vmatpush1.msra.mxu0 0.0
    %357 = vmatprep.subr.mxu0 0.0
    %358 = vmatpush1.msra.mxu0 0.0
    %359 = vmatprep.subr.mxu0 0.0
    %360 = vmatpush1.msra.mxu0 0.0
    %361 = vmatprep.subr.mxu0 0.0
    %362 = vmatpush1.msra.mxu0 0.0
    %363 = vmatprep.subr.mxu0 0.0
    %364 = vmatpush1.msra.mxu0 0.0
    %365 = vmatprep.subr.mxu0 0.0
    %366 = vmatpush1.msra.mxu0 0.0
    %367 = vmatprep.subr.mxu0 0.0
    %368 = vmatpush1.msra.mxu0 0.0
    %369 = vmatprep.subr.mxu0 0.0
    %370 = vmatpush1.msra.mxu0 0.0
    %371 = vmatprep.subr.mxu0 0.0
    %372 = vmatpush1.msra.mxu0 0.0
    %373 = vmatprep.subr.mxu0 0.0
    %374 = vmatpush1.msra.mxu0 0.0
    %375 = vmatprep.subr.mxu0 0.0
    %376 = vmatpush1.msra.mxu0 0.0
    %377 = vmatprep.subr.mxu0 0.0
    %378 = vmatpush1.msra.mxu0 0.0
    %379 = vmatprep.subr.mxu0 0.0
    %380 = vmatpush1.msra.mxu0 0.0
    %381 = vmatprep.subr.mxu0 0.0
    %382 = vmatpush1.msra.mxu0 0.0
    %383 = vmatprep.subr.mxu0 0.0
    %384 = vmatpush1.msra.mxu0 0.0
    %385 = vmatprep.subr.mxu0 0.0
    %386 = vmatpush1.msra.mxu0 0.0
    %387 = vmatprep.subr.mxu0 0.0
    %388 = vmatpush1.msra.mxu0 0.0
    %389 = vmatprep.subr.mxu0 0.0
    %390 = vmatpush1.msra.mxu0 0.0
    %391 = vmatprep.subr.mxu0 0.0
    %392 = vmatpush1.msra.mxu0 0.0
    %393 = vmatprep.subr.mxu0 0.0
    %394 = vmatpush1.msra.mxu0 0.0
    %395 = vmatprep.subr.mxu0 0.0
    %396 = vmatpush1.msra.mxu0 0.0
    %397 = vmatprep.subr.mxu0 0.0
    %398 = vmatpush1.msra.mxu0 0.0
    %399 = vmatprep.subr.mxu0 0.0
    %400 = vmatpush1.msra.mxu0 0.0
    %401 = vmatprep.mubr.f32.mxu0 0.0
    %402 = vmatmul.mubr.f32.gmra.mrb[0].mxu0 %v246
    %v403 = vpop.f32.mrb[0].mxu0
    %v404 = vadd.f32 0.0, %v403
    %v405 = vpop.f32.mrb[0].mxu0
    %406 = vmatprep.mubr.f32.mxu0 0.0
    %407 = vmatmul.mubr.f32.gmra.mrb[0].mxu0 %v248
    %v408 = vpop.f32.mrb[0].mxu0
    %v409 = vadd.f32 0.0, %v408
    %v410 = vpop.f32.mrb[0].mxu0
    %411 = vdwg.mxu0
    %414 = vrot.lane.b32.xlu0 %v404, 32
    %v415 = vpop.permute.xlu0 %414
    %416 = vrot.lane.b32.xlu0 %v409, 32
    %v417 = vpop.permute.xlu0 %416
    %v420 = vadd.f32 %v55, %v415
    %v421 = vadd.f32 %v56, %v417
    %s422 = scalar_lea.vmem %s2, 40
    %v423 = vld [vmem:[%s422] sm:$0xff]
    %426 = vrot.lane.b32.xlu0 %v236, 112
    %v427 = vpop.permute.xlu0 %426
    %428 = vrot.lane.b32.xlu0 %v237, 112
    %v429 = vpop.permute.xlu0 %428
    %v430 = vsel %vm59, %v427, 0
    %v432 = vsel %vm59, %v429, 0
    %434 = vmatprep.subr.mxu0 0.0
    %435 = vmatpush1.msra.mxu0 %v423
    %436 = vmatprep.subr.mxu0 0.0
    %437 = vmatpush1.msra.mxu0 0.0
    %438 = vmatprep.subr.mxu0 0.0
    %439 = vmatpush1.msra.mxu0 0.0
    %440 = vmatprep.subr.mxu0 0.0
    %441 = vmatpush1.msra.mxu0 0.0
    %442 = vmatprep.subr.mxu0 0.0
    %443 = vmatpush1.msra.mxu0 0.0
    %444 = vmatprep.subr.mxu0 0.0
    %445 = vmatpush1.msra.mxu0 0.0
    %446 = vmatprep.subr.mxu0 0.0
    %447 = vmatpush1.msra.mxu0 0.0
    %448 = vmatprep.subr.mxu0 0.0
    %449 = vmatpush1.msra.mxu0 0.0
    %450 = vmatprep.subr.mxu0 0.0
    %451 = vmatpush1.msra.mxu0 0.0
    %452 = vmatprep.subr.mxu0 0.0
    %453 = vmatpush1.msra.mxu0 0.0
    %454 = vmatprep.subr.mxu0 0.0
    %455 = vmatpush1.msra.mxu0 0.0
    %456 = vmatprep.subr.mxu0 0.0
    %457 = vmatpush1.msra.mxu0 0.0
    %458 = vmatprep.subr.mxu0 0.0
    %459 = vmatpush1.msra.mxu0 0.0
    %460 = vmatprep.subr.mxu0 0.0
    %461 = vmatpush1.msra.mxu0 0.0
    %462 = vmatprep.subr.mxu0 0.0
    %463 = vmatpush1.msra.mxu0 0.0
    %464 = vmatprep.subr.mxu0 0.0
    %465 = vmatpush1.msra.mxu0 0.0
    %466 = vmatprep.subr.mxu0 0.0
    %467 = vmatpush1.msra.mxu0 0.0
    %468 = vmatprep.subr.mxu0 0.0
    %469 = vmatpush1.msra.mxu0 0.0
    %470 = vmatprep.subr.mxu0 0.0
    %471 = vmatpush1.msra.mxu0 0.0
    %472 = vmatprep.subr.mxu0 0.0
    %473 = vmatpush1.msra.mxu0 0.0
    %474 = vmatprep.subr.mxu0 0.0
    %475 = vmatpush1.msra.mxu0 0.0
    %476 = vmatprep.subr.mxu0 0.0
    %477 = vmatpush1.msra.mxu0 0.0
    %478 = vmatprep.subr.mxu0 0.0
    %479 = vmatpush1.msra.mxu0 0.0
    %480 = vmatprep.subr.mxu0 0.0
    %481 = vmatpush1.msra.mxu0 0.0
    %482 = vmatprep.subr.mxu0 0.0
    %483 = vmatpush1.msra.mxu0 0.0
    %484 = vmatprep.subr.mxu0 0.0
    %485 = vmatpush1.msra.mxu0 0.0
    %486 = vmatprep.subr.mxu0 0.0
    %487 = vmatpush1.msra.mxu0 0.0
    %488 = vmatprep.subr.mxu0 0.0
    %489 = vmatpush1.msra.mxu0 0.0
    %490 = vmatprep.subr.mxu0 0.0
    %491 = vmatpush1.msra.mxu0 0.0
    %492 = vmatprep.subr.mxu0 0.0
    %493 = vmatpush1.msra.mxu0 0.0
    %494 = vmatprep.subr.mxu0 0.0
    %495 = vmatpush1.msra.mxu0 0.0
    %496 = vmatprep.subr.mxu0 0.0
    %497 = vmatpush1.msra.mxu0 0.0
    %498 = vmatprep.mubr.f32.mxu0 0.0
    %499 = vmatmul.mubr.f32.gmra.mrb[0].mxu0 %v430
    %v500 = vpop.f32.mrb[0].mxu0
    %v501 = vadd.f32 0.0, %v500
    %v502 = vpop.f32.mrb[0].mxu0
    %503 = vmatprep.mubr.f32.mxu0 0.0
    %504 = vmatmul.mubr.f32.gmra.mrb[0].mxu0 %v432
    %v505 = vpop.f32.mrb[0].mxu0
    %v506 = vadd.f32 0.0, %v505
    %v507 = vpop.f32.mrb[0].mxu0
    %508 = vdwg.mxu0
    %511 = vrot.lane.b32.xlu0 %v501, 40
    %v512 = vpop.permute.xlu0 %511
    %513 = vrot.lane.b32.xlu0 %v506, 40
    %v514 = vpop.permute.xlu0 %513
    %v517 = vadd.f32 %v55, %v512
    %v518 = vadd.f32 %v56, %v514
    %s519 = scalar_lea.vmem %s2, 48
    %v520 = vld [vmem:[%s519] sm:$0xff]
    %521 = vmatprep.subr.mxu0 0.0
    %522 = vmatpush1.msra.mxu0 %v520
    %523 = vmatprep.subr.mxu0 0.0
    %524 = vmatpush1.msra.mxu0 0.0
    %525 = vmatprep.subr.mxu0 0.0
    %526 = vmatpush1.msra.mxu0 0.0
    %527 = vmatprep.subr.mxu0 0.0
    %528 = vmatpush1.msra.mxu0 0.0
    %529 = vmatprep.subr.mxu0 0.0
    %530 = vmatpush1.msra.mxu0 0.0
    %531 = vmatprep.subr.mxu0 0.0
    %532 = vmatpush1.msra.mxu0 0.0
    %533 = vmatprep.subr.mxu0 0.0
    %534 = vmatpush1.msra.mxu0 0.0
    %535 = vmatprep.subr.mxu0 0.0
    %536 = vmatpush1.msra.mxu0 0.0
    %537 = vmatprep.subr.mxu0 0.0
    %538 = vmatpush1.msra.mxu0 0.0
    %539 = vmatprep.subr.mxu0 0.0
    %540 = vmatpush1.msra.mxu0 0.0
    %541 = vmatprep.subr.mxu0 0.0
    %542 = vmatpush1.msra.mxu0 0.0
    %543 = vmatprep.subr.mxu0 0.0
    %544 = vmatpush1.msra.mxu0 0.0
    %545 = vmatprep.subr.mxu0 0.0
    %546 = vmatpush1.msra.mxu0 0.0
    %547 = vmatprep.subr.mxu0 0.0
    %548 = vmatpush1.msra.mxu0 0.0
    %549 = vmatprep.subr.mxu0 0.0
    %550 = vmatpush1.msra.mxu0 0.0
    %551 = vmatprep.subr.mxu0 0.0
    %552 = vmatpush1.msra.mxu0 0.0
    %553 = vmatprep.subr.mxu0 0.0
    %554 = vmatpush1.msra.mxu0 0.0
    %555 = vmatprep.subr.mxu0 0.0
    %556 = vmatpush1.msra.mxu0 0.0
    %557 = vmatprep.subr.mxu0 0.0
    %558 = vmatpush1.msra.mxu0 0.0
    %559 = vmatprep.subr.mxu0 0.0
    %560 = vmatpush1.msra.mxu0 0.0
    %561 = vmatprep.subr.mxu0 0.0
    %562 = vmatpush1.msra.mxu0 0.0
    %563 = vmatprep.subr.mxu0 0.0
    %564 = vmatpush1.msra.mxu0 0.0
    %565 = vmatprep.subr.mxu0 0.0
    %566 = vmatpush1.msra.mxu0 0.0
    %567 = vmatprep.subr.mxu0 0.0
    %568 = vmatpush1.msra.mxu0 0.0
    %569 = vmatprep.subr.mxu0 0.0
    %570 = vmatpush1.msra.mxu0 0.0
    %571 = vmatprep.subr.mxu0 0.0
    %572 = vmatpush1.msra.mxu0 0.0
    %573 = vmatprep.subr.mxu0 0.0
    %574 = vmatpush1.msra.mxu0 0.0
    %575 = vmatprep.subr.mxu0 0.0
    %576 = vmatpush1.msra.mxu0 0.0
    %577 = vmatprep.subr.mxu0 0.0
    %578 = vmatpush1.msra.mxu0 0.0
    %579 = vmatprep.subr.mxu0 0.0
    %580 = vmatpush1.msra.mxu0 0.0
    %581 = vmatprep.subr.mxu0 0.0
    %582 = vmatpush1.msra.mxu0 0.0
    %583 = vmatprep.subr.mxu0 0.0
    %584 = vmatpush1.msra.mxu0 0.0
    %585 = vmatprep.mubr.f32.mxu0 0.0
    %586 = vmatmul.mubr.f32.gmra.mrb[0].mxu0 %v430
    %v587 = vpop.f32.mrb[0].mxu0
    %v588 = vadd.f32 0.0, %v587
    %v589 = vpop.f32.mrb[0].mxu0
    %590 = vmatprep.mubr.f32.mxu0 0.0
    %591 = vmatmul.mubr.f32.gmra.mrb[0].mxu0 %v432
    %v592 = vpop.f32.mrb[0].mxu0
    %v593 = vadd.f32 0.0, %v592
    %v594 = vpop.f32.mrb[0].mxu0
    %595 = vdwg.mxu0
    %598 = vrot.lane.b32.xlu0 %v588, 48
    %v599 = vpop.permute.xlu0 %598
    %600 = vrot.lane.b32.xlu0 %v593, 48
    %v601 = vpop.permute.xlu0 %600
    %v604 = vadd.f32 %v55, %v599
    %v605 = vadd.f32 %v56, %v601
    %s606 = scalar_lea.vmem %s2, 56
    %v607 = vld [vmem:[%s606] sm:$0xff]
    %610 = vrot.lane.b32.xlu0 %v333, 104
    %v611 = vpop.permute.xlu0 %610
    %612 = vrot.lane.b32.xlu0 %v334, 104
    %v613 = vpop.permute.xlu0 %612
    %v614 = vsel %vm59, %v611, 0
    %v616 = vsel %vm59, %v613, 0
    %618 = vmatprep.subr.mxu0 0.0
    %619 = vmatpush1.msra.mxu0 %v607
    %620 = vmatprep.subr.mxu0 0.0
    %621 = vmatpush1.msra.mxu0 0.0
    %622 = vmatprep.subr.mxu0 0.0
    %623 = vmatpush1.msra.mxu0 0.0
    %624 = vmatprep.subr.mxu0 0.0
    %625 = vmatpush1.msra.mxu0 0.0
    %626 = vmatprep.subr.mxu0 0.0
    %627 = vmatpush1.msra.mxu0 0.0
    %628 = vmatprep.subr.mxu0 0.0
    %629 = vmatpush1.msra.mxu0 0.0
    %630 = vmatprep.subr.mxu0 0.0
    %631 = vmatpush1.msra.mxu0 0.0
    %632 = vmatprep.subr.mxu0 0.0
    %633 = vmatpush1.msra.mxu0 0.0
    %634 = vmatprep.subr.mxu0 0.0
    %635 = vmatpush1.msra.mxu0 0.0
    %636 = vmatprep.subr.mxu0 0.0
    %637 = vmatpush1.msra.mxu0 0.0
    %638 = vmatprep.subr.mxu0 0.0
    %639 = vmatpush1.msra.mxu0 0.0
    %640 = vmatprep.subr.mxu0 0.0
    %641 = vmatpush1.msra.mxu0 0.0
    %642 = vmatprep.subr.mxu0 0.0
    %643 = vmatpush1.msra.mxu0 0.0
    %644 = vmatprep.subr.mxu0 0.0
    %645 = vmatpush1.msra.mxu0 0.0
    %646 = vmatprep.subr.mxu0 0.0
    %647 = vmatpush1.msra.mxu0 0.0
    %648 = vmatprep.subr.mxu0 0.0
    %649 = vmatpush1.msra.mxu0 0.0
    %650 = vmatprep.subr.mxu0 0.0
    %651 = vmatpush1.msra.mxu0 0.0
    %652 = vmatprep.subr.mxu0 0.0
    %653 = vmatpush1.msra.mxu0 0.0
    %654 = vmatprep.subr.mxu0 0.0
    %655 = vmatpush1.msra.mxu0 0.0
    %656 = vmatprep.subr.mxu0 0.0
    %657 = vmatpush1.msra.mxu0 0.0
    %658 = vmatprep.subr.mxu0 0.0
    %659 = vmatpush1.msra.mxu0 0.0
    %660 = vmatprep.subr.mxu0 0.0
    %661 = vmatpush1.msra.mxu0 0.0
    %662 = vmatprep.subr.mxu0 0.0
    %663 = vmatpush1.msra.mxu0 0.0
    %664 = vmatprep.subr.mxu0 0.0
    %665 = vmatpush1.msra.mxu0 0.0
    %666 = vmatprep.subr.mxu0 0.0
    %667 = vmatpush1.msra.mxu0 0.0
    %668 = vmatprep.subr.mxu0 0.0
    %669 = vmatpush1.msra.mxu0 0.0
    %670 = vmatprep.subr.mxu0 0.0
    %671 = vmatpush1.msra.mxu0 0.0
    %672 = vmatprep.subr.mxu0 0.0
    %673 = vmatpush1.msra.mxu0 0.0
    %674 = vmatprep.subr.mxu0 0.0
    %675 = vmatpush1.msra.mxu0 0.0
    %676 = vmatprep.subr.mxu0 0.0
    %677 = vmatpush1.msra.mxu0 0.0
    %678 = vmatprep.subr.mxu0 0.0
    %679 = vmatpush1.msra.mxu0 0.0
    %680 = vmatprep.subr.mxu0 0.0
    %681 = vmatpush1.msra.mxu0 0.0
    %682 = vmatprep.mubr.f32.mxu0 0.0
    %683 = vmatmul.mubr.f32.gmra.mrb[0].mxu0 %v614
    %v684 = vpop.f32.mrb[0].mxu0
    %v685 = vadd.f32 0.0, %v684
    %v686 = vpop.f32.mrb[0].mxu0
    %687 = vmatprep.mubr.f32.mxu0 0.0
    %688 = vmatmul.mubr.f32.gmra.mrb[0].mxu0 %v616
    %v689 = vpop.f32.mrb[0].mxu0
    %v690 = vadd.f32 0.0, %v689
    %v691 = vpop.f32.mrb[0].mxu0
    %692 = vdwg.mxu0
    %695 = vrot.lane.b32.xlu0 %v685, 56
    %v696 = vpop.permute.xlu0 %695
    %697 = vrot.lane.b32.xlu0 %v690, 56
    %v698 = vpop.permute.xlu0 %697
    %v701 = vadd.f32 %v55, %v696
    %v702 = vadd.f32 %v56, %v698
    %s703 = scalar_lea.vmem %s2, 64
    %v704 = vld [vmem:[%s703] sm:$0xff]
    %705 = vmatprep.subr.mxu0 0.0
    %706 = vmatpush1.msra.mxu0 %v704
    %707 = vmatprep.subr.mxu0 0.0
    %708 = vmatpush1.msra.mxu0 0.0
    %709 = vmatprep.subr.mxu0 0.0
    %710 = vmatpush1.msra.mxu0 0.0
    %711 = vmatprep.subr.mxu0 0.0
    %712 = vmatpush1.msra.mxu0 0.0
    %713 = vmatprep.subr.mxu0 0.0
    %714 = vmatpush1.msra.mxu0 0.0
    %715 = vmatprep.subr.mxu0 0.0
    %716 = vmatpush1.msra.mxu0 0.0
    %717 = vmatprep.subr.mxu0 0.0
    %718 = vmatpush1.msra.mxu0 0.0
    %719 = vmatprep.subr.mxu0 0.0
    %720 = vmatpush1.msra.mxu0 0.0
    %721 = vmatprep.subr.mxu0 0.0
    %722 = vmatpush1.msra.mxu0 0.0
    %723 = vmatprep.subr.mxu0 0.0
    %724 = vmatpush1.msra.mxu0 0.0
    %725 = vmatprep.subr.mxu0 0.0
    %726 = vmatpush1.msra.mxu0 0.0
    %727 = vmatprep.subr.mxu0 0.0
    %728 = vmatpush1.msra.mxu0 0.0
    %729 = vmatprep.subr.mxu0 0.0
    %730 = vmatpush1.msra.mxu0 0.0
    %731 = vmatprep.subr.mxu0 0.0
    %732 = vmatpush1.msra.mxu0 0.0
    %733 = vmatprep.subr.mxu0 0.0
    %734 = vmatpush1.msra.mxu0 0.0
    %735 = vmatprep.subr.mxu0 0.0
    %736 = vmatpush1.msra.mxu0 0.0
    %737 = vmatprep.subr.mxu0 0.0
    %738 = vmatpush1.msra.mxu0 0.0
    %739 = vmatprep.subr.mxu0 0.0
    %740 = vmatpush1.msra.mxu0 0.0
    %741 = vmatprep.subr.mxu0 0.0
    %742 = vmatpush1.msra.mxu0 0.0
    %743 = vmatprep.subr.mxu0 0.0
    %744 = vmatpush1.msra.mxu0 0.0
    %745 = vmatprep.subr.mxu0 0.0
    %746 = vmatpush1.msra.mxu0 0.0
    %747 = vmatprep.subr.mxu0 0.0
    %748 = vmatpush1.msra.mxu0 0.0
    %749 = vmatprep.subr.mxu0 0.0
    %750 = vmatpush1.msra.mxu0 0.0
    %751 = vmatprep.subr.mxu0 0.0
    %752 = vmatpush1.msra.mxu0 0.0
    %753 = vmatprep.subr.mxu0 0.0
    %754 = vmatpush1.msra.mxu0 0.0
    %755 = vmatprep.subr.mxu0 0.0
    %756 = vmatpush1.msra.mxu0 0.0
    %757 = vmatprep.subr.mxu0 0.0
    %758 = vmatpush1.msra.mxu0 0.0
    %759 = vmatprep.subr.mxu0 0.0
    %760 = vmatpush1.msra.mxu0 0.0
    %761 = vmatprep.subr.mxu0 0.0
    %762 = vmatpush1.msra.mxu0 0.0
    %763 = vmatprep.subr.mxu0 0.0
    %764 = vmatpush1.msra.mxu0 0.0
    %765 = vmatprep.subr.mxu0 0.0
    %766 = vmatpush1.msra.mxu0 0.0
    %767 = vmatprep.subr.mxu0 0.0
    %768 = vmatpush1.msra.mxu0 0.0
    %769 = vmatprep.mubr.f32.mxu0 0.0
    %770 = vmatmul.mubr.f32.gmra.mrb[0].mxu0 %v614
    %v771 = vpop.f32.mrb[0].mxu0
    %v772 = vadd.f32 0.0, %v771
    %v773 = vpop.f32.mrb[0].mxu0
    %774 = vmatprep.mubr.f32.mxu0 0.0
    %775 = vmatmul.mubr.f32.gmra.mrb[0].mxu0 %v616
    %v776 = vpop.f32.mrb[0].mxu0
    %v777 = vadd.f32 0.0, %v776
    %v778 = vpop.f32.mrb[0].mxu0
    %779 = vdwg.mxu0
    %782 = vrot.lane.b32.xlu0 %v772, 64
    %v783 = vpop.permute.xlu0 %782
    %784 = vrot.lane.b32.xlu0 %v777, 64
    %v785 = vpop.permute.xlu0 %784
    %v788 = vadd.f32 %v55, %v783
    %v789 = vadd.f32 %v56, %v785
    %s790 = scalar_lea.vmem %s2, 72
    %v791 = vld [vmem:[%s790] sm:$0xff]
    %794 = vrot.lane.b32.xlu0 %v420, 96
    %v795 = vpop.permute.xlu0 %794
    %796 = vrot.lane.b32.xlu0 %v421, 96
    %v797 = vpop.permute.xlu0 %796
    %v798 = vsel %vm59, %v795, 0
    %v800 = vsel %vm59, %v797, 0
    %802 = vmatprep.subr.mxu0 0.0
    %803 = vmatpush1.msra.mxu0 %v791
    %804 = vmatprep.subr.mxu0 0.0
    %805 = vmatpush1.msra.mxu0 0.0
    %806 = vmatprep.subr.mxu0 0.0
    %807 = vmatpush1.msra.mxu0 0.0
    %808 = vmatprep.subr.mxu0 0.0
    %809 = vmatpush1.msra.mxu0 0.0
    %810 = vmatprep.subr.mxu0 0.0
    %811 = vmatpush1.msra.mxu0 0.0
    %812 = vmatprep.subr.mxu0 0.0
    %813 = vmatpush1.msra.mxu0 0.0
    %814 = vmatprep.subr.mxu0 0.0
    %815 = vmatpush1.msra.mxu0 0.0
    %816 = vmatprep.subr.mxu0 0.0
    %817 = vmatpush1.msra.mxu0 0.0
    %818 = vmatprep.subr.mxu0 0.0
    %819 = vmatpush1.msra.mxu0 0.0
    %820 = vmatprep.subr.mxu0 0.0
    %821 = vmatpush1.msra.mxu0 0.0
    %822 = vmatprep.subr.mxu0 0.0
    %823 = vmatpush1.msra.mxu0 0.0
    %824 = vmatprep.subr.mxu0 0.0
    %825 = vmatpush1.msra.mxu0 0.0
    %826 = vmatprep.subr.mxu0 0.0
    %827 = vmatpush1.msra.mxu0 0.0
    %828 = vmatprep.subr.mxu0 0.0
    %829 = vmatpush1.msra.mxu0 0.0
    %830 = vmatprep.subr.mxu0 0.0
    %831 = vmatpush1.msra.mxu0 0.0
    %832 = vmatprep.subr.mxu0 0.0
    %833 = vmatpush1.msra.mxu0 0.0
    %834 = vmatprep.subr.mxu0 0.0
    %835 = vmatpush1.msra.mxu0 0.0
    %836 = vmatprep.subr.mxu0 0.0
    %837 = vmatpush1.msra.mxu0 0.0
    %838 = vmatprep.subr.mxu0 0.0
    %839 = vmatpush1.msra.mxu0 0.0
    %840 = vmatprep.subr.mxu0 0.0
    %841 = vmatpush1.msra.mxu0 0.0
    %842 = vmatprep.subr.mxu0 0.0
    %843 = vmatpush1.msra.mxu0 0.0
    %844 = vmatprep.subr.mxu0 0.0
    %845 = vmatpush1.msra.mxu0 0.0
    %846 = vmatprep.subr.mxu0 0.0
    %847 = vmatpush1.msra.mxu0 0.0
    %848 = vmatprep.subr.mxu0 0.0
    %849 = vmatpush1.msra.mxu0 0.0
    %850 = vmatprep.subr.mxu0 0.0
    %851 = vmatpush1.msra.mxu0 0.0
    %852 = vmatprep.subr.mxu0 0.0
    %853 = vmatpush1.msra.mxu0 0.0
    %854 = vmatprep.subr.mxu0 0.0
    %855 = vmatpush1.msra.mxu0 0.0
    %856 = vmatprep.subr.mxu0 0.0
    %857 = vmatpush1.msra.mxu0 0.0
    %858 = vmatprep.subr.mxu0 0.0
    %859 = vmatpush1.msra.mxu0 0.0
    %860 = vmatprep.subr.mxu0 0.0
    %861 = vmatpush1.msra.mxu0 0.0
    %862 = vmatprep.subr.mxu0 0.0
    %863 = vmatpush1.msra.mxu0 0.0
    %864 = vmatprep.subr.mxu0 0.0
    %865 = vmatpush1.msra.mxu0 0.0
    %866 = vmatprep.mubr.f32.mxu0 0.0
    %867 = vmatmul.mubr.f32.gmra.mrb[0].mxu0 %v798
    %v868 = vpop.f32.mrb[0].mxu0
    %v869 = vadd.f32 0.0, %v868
    %v870 = vpop.f32.mrb[0].mxu0
    %871 = vmatprep.mubr.f32.mxu0 0.0
    %872 = vmatmul.mubr.f32.gmra.mrb[0].mxu0 %v800
    %v873 = vpop.f32.mrb[0].mxu0
    %v874 = vadd.f32 0.0, %v873
    %v875 = vpop.f32.mrb[0].mxu0
    %876 = vdwg.mxu0
    %879 = vrot.lane.b32.xlu0 %v869, 72
    %v880 = vpop.permute.xlu0 %879
    %881 = vrot.lane.b32.xlu0 %v874, 72
    %v882 = vpop.permute.xlu0 %881
    %v885 = vadd.f32 %v55, %v880
    %v886 = vadd.f32 %v56, %v882
    %s887 = scalar_lea.vmem %s2, 80
    %v888 = vld [vmem:[%s887] sm:$0xff]
    %889 = vmatprep.subr.mxu0 0.0
    %890 = vmatpush1.msra.mxu0 %v888
    %891 = vmatprep.subr.mxu0 0.0
    %892 = vmatpush1.msra.mxu0 0.0
    %893 = vmatprep.subr.mxu0 0.0
    %894 = vmatpush1.msra.mxu0 0.0
    %895 = vmatprep.subr.mxu0 0.0
    %896 = vmatpush1.msra.mxu0 0.0
    %897 = vmatprep.subr.mxu0 0.0
    %898 = vmatpush1.msra.mxu0 0.0
    %899 = vmatprep.subr.mxu0 0.0
    %900 = vmatpush1.msra.mxu0 0.0
    %901 = vmatprep.subr.mxu0 0.0
    %902 = vmatpush1.msra.mxu0 0.0
    %903 = vmatprep.subr.mxu0 0.0
    %904 = vmatpush1.msra.mxu0 0.0
    %905 = vmatprep.subr.mxu0 0.0
    %906 = vmatpush1.msra.mxu0 0.0
    %907 = vmatprep.subr.mxu0 0.0
    %908 = vmatpush1.msra.mxu0 0.0
    %909 = vmatprep.subr.mxu0 0.0
    %910 = vmatpush1.msra.mxu0 0.0
    %911 = vmatprep.subr.mxu0 0.0
    %912 = vmatpush1.msra.mxu0 0.0
    %913 = vmatprep.subr.mxu0 0.0
    %914 = vmatpush1.msra.mxu0 0.0
    %915 = vmatprep.subr.mxu0 0.0
    %916 = vmatpush1.msra.mxu0 0.0
    %917 = vmatprep.subr.mxu0 0.0
    %918 = vmatpush1.msra.mxu0 0.0
    %919 = vmatprep.subr.mxu0 0.0
    %920 = vmatpush1.msra.mxu0 0.0
    %921 = vmatprep.subr.mxu0 0.0
    %922 = vmatpush1.msra.mxu0 0.0
    %923 = vmatprep.subr.mxu0 0.0
    %924 = vmatpush1.msra.mxu0 0.0
    %925 = vmatprep.subr.mxu0 0.0
    %926 = vmatpush1.msra.mxu0 0.0
    %927 = vmatprep.subr.mxu0 0.0
    %928 = vmatpush1.msra.mxu0 0.0
    %929 = vmatprep.subr.mxu0 0.0
    %930 = vmatpush1.msra.mxu0 0.0
    %931 = vmatprep.subr.mxu0 0.0
    %932 = vmatpush1.msra.mxu0 0.0
    %933 = vmatprep.subr.mxu0 0.0
    %934 = vmatpush1.msra.mxu0 0.0
    %935 = vmatprep.subr.mxu0 0.0
    %936 = vmatpush1.msra.mxu0 0.0
    %937 = vmatprep.subr.mxu0 0.0
    %938 = vmatpush1.msra.mxu0 0.0
    %939 = vmatprep.subr.mxu0 0.0
    %940 = vmatpush1.msra.mxu0 0.0
    %941 = vmatprep.subr.mxu0 0.0
    %942 = vmatpush1.msra.mxu0 0.0
    %943 = vmatprep.subr.mxu0 0.0
    %944 = vmatpush1.msra.mxu0 0.0
    %945 = vmatprep.subr.mxu0 0.0
    %946 = vmatpush1.msra.mxu0 0.0
    %947 = vmatprep.subr.mxu0 0.0
    %948 = vmatpush1.msra.mxu0 0.0
    %949 = vmatprep.subr.mxu0 0.0
    %950 = vmatpush1.msra.mxu0 0.0
    %951 = vmatprep.subr.mxu0 0.0
    %952 = vmatpush1.msra.mxu0 0.0
    %953 = vmatprep.mubr.f32.mxu0 0.0
    %954 = vmatmul.mubr.f32.gmra.mrb[0].mxu0 %v798
    %v955 = vpop.f32.mrb[0].mxu0
    %v956 = vadd.f32 0.0, %v955
    %v957 = vpop.f32.mrb[0].mxu0
    %958 = vmatprep.mubr.f32.mxu0 0.0
    %959 = vmatmul.mubr.f32.gmra.mrb[0].mxu0 %v800
    %v960 = vpop.f32.mrb[0].mxu0
    %v961 = vadd.f32 0.0, %v960
    %v962 = vpop.f32.mrb[0].mxu0
    %963 = vdwg.mxu0
    %966 = vrot.lane.b32.xlu0 %v956, 80
    %v967 = vpop.permute.xlu0 %966
    %968 = vrot.lane.b32.xlu0 %v961, 80
    %v969 = vpop.permute.xlu0 %968
    %v972 = vadd.f32 %v55, %v967
    %v973 = vadd.f32 %v56, %v969
    %s974 = scalar_lea.vmem %s2, 88
    %v975 = vld [vmem:[%s974] sm:$0xff]
    %978 = vrot.lane.b32.xlu0 %v517, 88
    %v979 = vpop.permute.xlu0 %978
    %980 = vrot.lane.b32.xlu0 %v518, 88
    %v981 = vpop.permute.xlu0 %980
    %v982 = vsel %vm59, %v979, 0
    %v984 = vsel %vm59, %v981, 0
    %986 = vmatprep.subr.mxu0 0.0
    %987 = vmatpush1.msra.mxu0 %v975
    %988 = vmatprep.subr.mxu0 0.0
    %989 = vmatpush1.msra.mxu0 0.0
    %990 = vmatprep.subr.mxu0 0.0
    %991 = vmatpush1.msra.mxu0 0.0
    %992 = vmatprep.subr.mxu0 0.0
    %993 = vmatpush1.msra.mxu0 0.0
    %994 = vmatprep.subr.mxu0 0.0
    %995 = vmatpush1.msra.mxu0 0.0
    %996 = vmatprep.subr.mxu0 0.0
    %997 = vmatpush1.msra.mxu0 0.0
    %998 = vmatprep.subr.mxu0 0.0
    %999 = vmatpush1.msra.mxu0 0.0
    %1000 = vmatprep.subr.mxu0 0.0
    %1001 = vmatpush1.msra.mxu0 0.0
    %1002 = vmatprep.subr.mxu0 0.0
    %1003 = vmatpush1.msra.mxu0 0.0
    %1004 = vmatprep.subr.mxu0 0.0
    %1005 = vmatpush1.msra.mxu0 0.0
    %1006 = vmatprep.subr.mxu0 0.0
    %1007 = vmatpush1.msra.mxu0 0.0
    %1008 = vmatprep.subr.mxu0 0.0
    %1009 = vmatpush1.msra.mxu0 0.0
    %1010 = vmatprep.subr.mxu0 0.0
    %1011 = vmatpush1.msra.mxu0 0.0
    %1012 = vmatprep.subr.mxu0 0.0
    %1013 = vmatpush1.msra.mxu0 0.0
    %1014 = vmatprep.subr.mxu0 0.0
    %1015 = vmatpush1.msra.mxu0 0.0
    %1016 = vmatprep.subr.mxu0 0.0
    %1017 = vmatpush1.msra.mxu0 0.0
    %1018 = vmatprep.subr.mxu0 0.0
    %1019 = vmatpush1.msra.mxu0 0.0
    %1020 = vmatprep.subr.mxu0 0.0
    %1021 = vmatpush1.msra.mxu0 0.0
    %1022 = vmatprep.subr.mxu0 0.0
    %1023 = vmatpush1.msra.mxu0 0.0
    %1024 = vmatprep.subr.mxu0 0.0
    %1025 = vmatpush1.msra.mxu0 0.0
    %1026 = vmatprep.subr.mxu0 0.0
    %1027 = vmatpush1.msra.mxu0 0.0
    %1028 = vmatprep.subr.mxu0 0.0
    %1029 = vmatpush1.msra.mxu0 0.0
    %1030 = vmatprep.subr.mxu0 0.0
    %1031 = vmatpush1.msra.mxu0 0.0
    %1032 = vmatprep.subr.mxu0 0.0
    %1033 = vmatpush1.msra.mxu0 0.0
    %1034 = vmatprep.subr.mxu0 0.0
    %1035 = vmatpush1.msra.mxu0 0.0
    %1036 = vmatprep.subr.mxu0 0.0
    %1037 = vmatpush1.msra.mxu0 0.0
    %1038 = vmatprep.subr.mxu0 0.0
    %1039 = vmatpush1.msra.mxu0 0.0
    %1040 = vmatprep.subr.mxu0 0.0
    %1041 = vmatpush1.msra.mxu0 0.0
    %1042 = vmatprep.subr.mxu0 0.0
    %1043 = vmatpush1.msra.mxu0 0.0
    %1044 = vmatprep.subr.mxu0 0.0
    %1045 = vmatpush1.msra.mxu0 0.0
    %1046 = vmatprep.subr.mxu0 0.0
    %1047 = vmatpush1.msra.mxu0 0.0
    %1048 = vmatprep.subr.mxu0 0.0
    %1049 = vmatpush1.msra.mxu0 0.0
    %1050 = vmatprep.mubr.f32.mxu0 0.0
    %1051 = vmatmul.mubr.f32.gmra.mrb[0].mxu0 %v982
    %v1052 = vpop.f32.mrb[0].mxu0
    %v1053 = vadd.f32 0.0, %v1052
    %v1054 = vpop.f32.mrb[0].mxu0
    %1055 = vmatprep.mubr.f32.mxu0 0.0
    %1056 = vmatmul.mubr.f32.gmra.mrb[0].mxu0 %v984
    %v1057 = vpop.f32.mrb[0].mxu0
    %v1058 = vadd.f32 0.0, %v1057
    %v1059 = vpop.f32.mrb[0].mxu0
    %1060 = vdwg.mxu0
    %1063 = vrot.lane.b32.xlu0 %v1053, 88
    %v1064 = vpop.permute.xlu0 %1063
    %1065 = vrot.lane.b32.xlu0 %v1058, 88
    %v1066 = vpop.permute.xlu0 %1065
    %v1069 = vadd.f32 %v55, %v1064
    %v1070 = vadd.f32 %v56, %v1066
    %s1071 = scalar_lea.vmem %s2, 96
    %v1072 = vld [vmem:[%s1071] sm:$0xff]
    %1073 = vmatprep.subr.mxu0 0.0
    %1074 = vmatpush1.msra.mxu0 %v1072
    %1075 = vmatprep.subr.mxu0 0.0
    %1076 = vmatpush1.msra.mxu0 0.0
    %1077 = vmatprep.subr.mxu0 0.0
    %1078 = vmatpush1.msra.mxu0 0.0
    %1079 = vmatprep.subr.mxu0 0.0
    %1080 = vmatpush1.msra.mxu0 0.0
    %1081 = vmatprep.subr.mxu0 0.0
    %1082 = vmatpush1.msra.mxu0 0.0
    %1083 = vmatprep.subr.mxu0 0.0
    %1084 = vmatpush1.msra.mxu0 0.0
    %1085 = vmatprep.subr.mxu0 0.0
    %1086 = vmatpush1.msra.mxu0 0.0
    %1087 = vmatprep.subr.mxu0 0.0
    %1088 = vmatpush1.msra.mxu0 0.0
    %1089 = vmatprep.subr.mxu0 0.0
    %1090 = vmatpush1.msra.mxu0 0.0
    %1091 = vmatprep.subr.mxu0 0.0
    %1092 = vmatpush1.msra.mxu0 0.0
    %1093 = vmatprep.subr.mxu0 0.0
    %1094 = vmatpush1.msra.mxu0 0.0
    %1095 = vmatprep.subr.mxu0 0.0
    %1096 = vmatpush1.msra.mxu0 0.0
    %1097 = vmatprep.subr.mxu0 0.0
    %1098 = vmatpush1.msra.mxu0 0.0
    %1099 = vmatprep.subr.mxu0 0.0
    %1100 = vmatpush1.msra.mxu0 0.0
    %1101 = vmatprep.subr.mxu0 0.0
    %1102 = vmatpush1.msra.mxu0 0.0
    %1103 = vmatprep.subr.mxu0 0.0
    %1104 = vmatpush1.msra.mxu0 0.0
    %1105 = vmatprep.subr.mxu0 0.0
    %1106 = vmatpush1.msra.mxu0 0.0
    %1107 = vmatprep.subr.mxu0 0.0
    %1108 = vmatpush1.msra.mxu0 0.0
    %1109 = vmatprep.subr.mxu0 0.0
    %1110 = vmatpush1.msra.mxu0 0.0
    %1111 = vmatprep.subr.mxu0 0.0
    %1112 = vmatpush1.msra.mxu0 0.0
    %1113 = vmatprep.subr.mxu0 0.0
    %1114 = vmatpush1.msra.mxu0 0.0
    %1115 = vmatprep.subr.mxu0 0.0
    %1116 = vmatpush1.msra.mxu0 0.0
    %1117 = vmatprep.subr.mxu0 0.0
    %1118 = vmatpush1.msra.mxu0 0.0
    %1119 = vmatprep.subr.mxu0 0.0
    %1120 = vmatpush1.msra.mxu0 0.0
    %1121 = vmatprep.subr.mxu0 0.0
    %1122 = vmatpush1.msra.mxu0 0.0
    %1123 = vmatprep.subr.mxu0 0.0
    %1124 = vmatpush1.msra.mxu0 0.0
    %1125 = vmatprep.subr.mxu0 0.0
    %1126 = vmatpush1.msra.mxu0 0.0
    %1127 = vmatprep.subr.mxu0 0.0
    %1128 = vmatpush1.msra.mxu0 0.0
    %1129 = vmatprep.subr.mxu0 0.0
    %1130 = vmatpush1.msra.mxu0 0.0
    %1131 = vmatprep.subr.mxu0 0.0
    %1132 = vmatpush1.msra.mxu0 0.0
    %1133 = vmatprep.subr.mxu0 0.0
    %1134 = vmatpush1.msra.mxu0 0.0
    %1135 = vmatprep.subr.mxu0 0.0
    %1136 = vmatpush1.msra.mxu0 0.0
    %1137 = vmatprep.mubr.f32.mxu0 0.0
    %1138 = vmatmul.mubr.f32.gmra.mrb[0].mxu0 %v982
    %v1139 = vpop.f32.mrb[0].mxu0
    %v1140 = vadd.f32 0.0, %v1139
    %v1141 = vpop.f32.mrb[0].mxu0
    %1142 = vmatprep.mubr.f32.mxu0 0.0
    %1143 = vmatmul.mubr.f32.gmra.mrb[0].mxu0 %v984
    %v1144 = vpop.f32.mrb[0].mxu0
    %v1145 = vadd.f32 0.0, %v1144
    %v1146 = vpop.f32.mrb[0].mxu0
    %1147 = vdwg.mxu0
    %1150 = vrot.lane.b32.xlu0 %v1140, 96
    %v1151 = vpop.permute.xlu0 %1150
    %1152 = vrot.lane.b32.xlu0 %v1145, 96
    %v1153 = vpop.permute.xlu0 %1152
    %v1156 = vadd.f32 %v55, %v1151
    %v1157 = vadd.f32 %v56, %v1153
    %s1158 = scalar_lea.vmem %s2, 104
    %v1159 = vld [vmem:[%s1158] sm:$0xff]
    %1162 = vrot.lane.b32.xlu0 %v604, 80
    %v1163 = vpop.permute.xlu0 %1162
    %1164 = vrot.lane.b32.xlu0 %v605, 80
    %v1165 = vpop.permute.xlu0 %1164
    %v1166 = vsel %vm59, %v1163, 0
    %v1168 = vsel %vm59, %v1165, 0
    %1170 = vmatprep.subr.mxu0 0.0
    %1171 = vmatpush1.msra.mxu0 %v1159
    %1172 = vmatprep.subr.mxu0 0.0
    %1173 = vmatpush1.msra.mxu0 0.0
    %1174 = vmatprep.subr.mxu0 0.0
    %1175 = vmatpush1.msra.mxu0 0.0
    %1176 = vmatprep.subr.mxu0 0.0
    %1177 = vmatpush1.msra.mxu0 0.0
    %1178 = vmatprep.subr.mxu0 0.0
    %1179 = vmatpush1.msra.mxu0 0.0
    %1180 = vmatprep.subr.mxu0 0.0
    %1181 = vmatpush1.msra.mxu0 0.0
    %1182 = vmatprep.subr.mxu0 0.0
    %1183 = vmatpush1.msra.mxu0 0.0
    %1184 = vmatprep.subr.mxu0 0.0
    %1185 = vmatpush1.msra.mxu0 0.0
    %1186 = vmatprep.subr.mxu0 0.0
    %1187 = vmatpush1.msra.mxu0 0.0
    %1188 = vmatprep.subr.mxu0 0.0
    %1189 = vmatpush1.msra.mxu0 0.0
    %1190 = vmatprep.subr.mxu0 0.0
    %1191 = vmatpush1.msra.mxu0 0.0
    %1192 = vmatprep.subr.mxu0 0.0
    %1193 = vmatpush1.msra.mxu0 0.0
    %1194 = vmatprep.subr.mxu0 0.0
    %1195 = vmatpush1.msra.mxu0 0.0
    %1196 = vmatprep.subr.mxu0 0.0
    %1197 = vmatpush1.msra.mxu0 0.0
    %1198 = vmatprep.subr.mxu0 0.0
    %1199 = vmatpush1.msra.mxu0 0.0
    %1200 = vmatprep.subr.mxu0 0.0
    %1201 = vmatpush1.msra.mxu0 0.0
    %1202 = vmatprep.subr.mxu0 0.0
    %1203 = vmatpush1.msra.mxu0 0.0
    %1204 = vmatprep.subr.mxu0 0.0
    %1205 = vmatpush1.msra.mxu0 0.0
    %1206 = vmatprep.subr.mxu0 0.0
    %1207 = vmatpush1.msra.mxu0 0.0
    %1208 = vmatprep.subr.mxu0 0.0
    %1209 = vmatpush1.msra.mxu0 0.0
    %1210 = vmatprep.subr.mxu0 0.0
    %1211 = vmatpush1.msra.mxu0 0.0
    %1212 = vmatprep.subr.mxu0 0.0
    %1213 = vmatpush1.msra.mxu0 0.0
    %1214 = vmatprep.subr.mxu0 0.0
    %1215 = vmatpush1.msra.mxu0 0.0
    %1216 = vmatprep.subr.mxu0 0.0
    %1217 = vmatpush1.msra.mxu0 0.0
    %1218 = vmatprep.subr.mxu0 0.0
    %1219 = vmatpush1.msra.mxu0 0.0
    %1220 = vmatprep.subr.mxu0 0.0
    %1221 = vmatpush1.msra.mxu0 0.0
    %1222 = vmatprep.subr.mxu0 0.0
    %1223 = vmatpush1.msra.mxu0 0.0
    %1224 = vmatprep.subr.mxu0 0.0
    %1225 = vmatpush1.msra.mxu0 0.0
    %1226 = vmatprep.subr.mxu0 0.0
    %1227 = vmatpush1.msra.mxu0 0.0
    %1228 = vmatprep.subr.mxu0 0.0
    %1229 = vmatpush1.msra.mxu0 0.0
    %1230 = vmatprep.subr.mxu0 0.0
    %1231 = vmatpush1.msra.mxu0 0.0
    %1232 = vmatprep.subr.mxu0 0.0
    %1233 = vmatpush1.msra.mxu0 0.0
    %1234 = vmatprep.mubr.f32.mxu0 0.0
    %1235 = vmatmul.mubr.f32.gmra.mrb[0].mxu0 %v1166
    %v1236 = vpop.f32.mrb[0].mxu0
    %v1237 = vadd.f32 0.0, %v1236
    %v1238 = vpop.f32.mrb[0].mxu0
    %1239 = vmatprep.mubr.f32.mxu0 0.0
    %1240 = vmatmul.mubr.f32.gmra.mrb[0].mxu0 %v1168
    %v1241 = vpop.f32.mrb[0].mxu0
    %v1242 = vadd.f32 0.0, %v1241
    %v1243 = vpop.f32.mrb[0].mxu0
    %1244 = vdwg.mxu0
    %1247 = vrot.lane.b32.xlu0 %v1237, 104
    %v1248 = vpop.permute.xlu0 %1247
    %1249 = vrot.lane.b32.xlu0 %v1242, 104
    %v1250 = vpop.permute.xlu0 %1249
    %v1253 = vadd.f32 %v55, %v1248
    %v1254 = vadd.f32 %v56, %v1250
    %s1255 = scalar_lea.vmem %s2, 112
    %v1256 = vld [vmem:[%s1255] sm:$0xff]
    %1257 = vmatprep.subr.mxu0 0.0
    %1258 = vmatpush1.msra.mxu0 %v1256
    %1259 = vmatprep.subr.mxu0 0.0
    %1260 = vmatpush1.msra.mxu0 0.0
    %1261 = vmatprep.subr.mxu0 0.0
    %1262 = vmatpush1.msra.mxu0 0.0
    %1263 = vmatprep.subr.mxu0 0.0
    %1264 = vmatpush1.msra.mxu0 0.0
    %1265 = vmatprep.subr.mxu0 0.0
    %1266 = vmatpush1.msra.mxu0 0.0
    %1267 = vmatprep.subr.mxu0 0.0
    %1268 = vmatpush1.msra.mxu0 0.0
    %1269 = vmatprep.subr.mxu0 0.0
    %1270 = vmatpush1.msra.mxu0 0.0
    %1271 = vmatprep.subr.mxu0 0.0
    %1272 = vmatpush1.msra.mxu0 0.0
    %1273 = vmatprep.subr.mxu0 0.0
    %1274 = vmatpush1.msra.mxu0 0.0
    %1275 = vmatprep.subr.mxu0 0.0
    %1276 = vmatpush1.msra.mxu0 0.0
    %1277 = vmatprep.subr.mxu0 0.0
    %1278 = vmatpush1.msra.mxu0 0.0
    %1279 = vmatprep.subr.mxu0 0.0
    %1280 = vmatpush1.msra.mxu0 0.0
    %1281 = vmatprep.subr.mxu0 0.0
    %1282 = vmatpush1.msra.mxu0 0.0
    %1283 = vmatprep.subr.mxu0 0.0
    %1284 = vmatpush1.msra.mxu0 0.0
    %1285 = vmatprep.subr.mxu0 0.0
    %1286 = vmatpush1.msra.mxu0 0.0
    %1287 = vmatprep.subr.mxu0 0.0
    %1288 = vmatpush1.msra.mxu0 0.0
    %1289 = vmatprep.subr.mxu0 0.0
    %1290 = vmatpush1.msra.mxu0 0.0
    %1291 = vmatprep.subr.mxu0 0.0
    %1292 = vmatpush1.msra.mxu0 0.0
    %1293 = vmatprep.subr.mxu0 0.0
    %1294 = vmatpush1.msra.mxu0 0.0
    %1295 = vmatprep.subr.mxu0 0.0
    %1296 = vmatpush1.msra.mxu0 0.0
    %1297 = vmatprep.subr.mxu0 0.0
    %1298 = vmatpush1.msra.mxu0 0.0
    %1299 = vmatprep.subr.mxu0 0.0
    %1300 = vmatpush1.msra.mxu0 0.0
    %1301 = vmatprep.subr.mxu0 0.0
    %1302 = vmatpush1.msra.mxu0 0.0
    %1303 = vmatprep.subr.mxu0 0.0
    %1304 = vmatpush1.msra.mxu0 0.0
    %1305 = vmatprep.subr.mxu0 0.0
    %1306 = vmatpush1.msra.mxu0 0.0
    %1307 = vmatprep.subr.mxu0 0.0
    %1308 = vmatpush1.msra.mxu0 0.0
    %1309 = vmatprep.subr.mxu0 0.0
    %1310 = vmatpush1.msra.mxu0 0.0
    %1311 = vmatprep.subr.mxu0 0.0
    %1312 = vmatpush1.msra.mxu0 0.0
    %1313 = vmatprep.subr.mxu0 0.0
    %1314 = vmatpush1.msra.mxu0 0.0
    %1315 = vmatprep.subr.mxu0 0.0
    %1316 = vmatpush1.msra.mxu0 0.0
    %1317 = vmatprep.subr.mxu0 0.0
    %1318 = vmatpush1.msra.mxu0 0.0
    %1319 = vmatprep.subr.mxu0 0.0
    %1320 = vmatpush1.msra.mxu0 0.0
    %1321 = vmatprep.mubr.f32.mxu0 0.0
    %1322 = vmatmul.mubr.f32.gmra.mrb[0].mxu0 %v1166
    %v1323 = vpop.f32.mrb[0].mxu0
    %v1324 = vadd.f32 0.0, %v1323
    %v1325 = vpop.f32.mrb[0].mxu0
    %1326 = vmatprep.mubr.f32.mxu0 0.0
    %1327 = vmatmul.mubr.f32.gmra.mrb[0].mxu0 %v1168
    %v1328 = vpop.f32.mrb[0].mxu0
    %v1329 = vadd.f32 0.0, %v1328
    %v1330 = vpop.f32.mrb[0].mxu0
    %1331 = vdwg.mxu0
    %1334 = vrot.lane.b32.xlu0 %v1324, 112
    %v1335 = vpop.permute.xlu0 %1334
    %1336 = vrot.lane.b32.xlu0 %v1329, 112
    %v1337 = vpop.permute.xlu0 %1336
    %v1340 = vadd.f32 %v55, %v1335
    %v1341 = vadd.f32 %v56, %v1337
    %s1342 = scalar_lea.vmem %s2, 120
    %v1343 = vld [vmem:[%s1342] sm:$0xff]
    %1346 = vrot.lane.b32.xlu0 %v701, 72
    %v1347 = vpop.permute.xlu0 %1346
    %1348 = vrot.lane.b32.xlu0 %v702, 72
    %v1349 = vpop.permute.xlu0 %1348
    %v1350 = vsel %vm59, %v1347, 0
    %v1352 = vsel %vm59, %v1349, 0
    %1354 = vmatprep.subr.mxu0 0.0
    %1355 = vmatpush1.msra.mxu0 %v1343
    %1356 = vmatprep.subr.mxu0 0.0
    %1357 = vmatpush1.msra.mxu0 0.0
    %1358 = vmatprep.subr.mxu0 0.0
    %1359 = vmatpush1.msra.mxu0 0.0
    %1360 = vmatprep.subr.mxu0 0.0
    %1361 = vmatpush1.msra.mxu0 0.0
    %1362 = vmatprep.subr.mxu0 0.0
    %1363 = vmatpush1.msra.mxu0 0.0
    %1364 = vmatprep.subr.mxu0 0.0
    %1365 = vmatpush1.msra.mxu0 0.0
    %1366 = vmatprep.subr.mxu0 0.0
    %1367 = vmatpush1.msra.mxu0 0.0
    %1368 = vmatprep.subr.mxu0 0.0
    %1369 = vmatpush1.msra.mxu0 0.0
    %1370 = vmatprep.subr.mxu0 0.0
    %1371 = vmatpush1.msra.mxu0 0.0
    %1372 = vmatprep.subr.mxu0 0.0
    %1373 = vmatpush1.msra.mxu0 0.0
    %1374 = vmatprep.subr.mxu0 0.0
    %1375 = vmatpush1.msra.mxu0 0.0
    %1376 = vmatprep.subr.mxu0 0.0
    %1377 = vmatpush1.msra.mxu0 0.0
    %1378 = vmatprep.subr.mxu0 0.0
    %1379 = vmatpush1.msra.mxu0 0.0
    %1380 = vmatprep.subr.mxu0 0.0
    %1381 = vmatpush1.msra.mxu0 0.0
    %1382 = vmatprep.subr.mxu0 0.0
    %1383 = vmatpush1.msra.mxu0 0.0
    %1384 = vmatprep.subr.mxu0 0.0
    %1385 = vmatpush1.msra.mxu0 0.0
    %1386 = vmatprep.subr.mxu0 0.0
    %1387 = vmatpush1.msra.mxu0 0.0
    %1388 = vmatprep.subr.mxu0 0.0
    %1389 = vmatpush1.msra.mxu0 0.0
    %1390 = vmatprep.subr.mxu0 0.0
    %1391 = vmatpush1.msra.mxu0 0.0
    %1392 = vmatprep.subr.mxu0 0.0
    %1393 = vmatpush1.msra.mxu0 0.0
    %1394 = vmatprep.subr.mxu0 0.0
    %1395 = vmatpush1.msra.mxu0 0.0
    %1396 = vmatprep.subr.mxu0 0.0
    %1397 = vmatpush1.msra.mxu0 0.0
    %1398 = vmatprep.subr.mxu0 0.0
    %1399 = vmatpush1.msra.mxu0 0.0
    %1400 = vmatprep.subr.mxu0 0.0
    %1401 = vmatpush1.msra.mxu0 0.0
    %1402 = vmatprep.subr.mxu0 0.0
    %1403 = vmatpush1.msra.mxu0 0.0
    %1404 = vmatprep.subr.mxu0 0.0
    %1405 = vmatpush1.msra.mxu0 0.0
    %1406 = vmatprep.subr.mxu0 0.0
    %1407 = vmatpush1.msra.mxu0 0.0
    %1408 = vmatprep.subr.mxu0 0.0
    %1409 = vmatpush1.msra.mxu0 0.0
    %1410 = vmatprep.subr.mxu0 0.0
    %1411 = vmatpush1.msra.mxu0 0.0
    %1412 = vmatprep.subr.mxu0 0.0
    %1413 = vmatpush1.msra.mxu0 0.0
    %1414 = vmatprep.subr.mxu0 0.0
    %1415 = vmatpush1.msra.mxu0 0.0
    %1416 = vmatprep.subr.mxu0 0.0
    %1417 = vmatpush1.msra.mxu0 0.0
    %1418 = vmatprep.mubr.f32.mxu0 0.0
    %1419 = vmatmul.mubr.f32.gmra.mrb[0].mxu0 %v1350
    %v1420 = vpop.f32.mrb[0].mxu0
    %v1421 = vadd.f32 0.0, %v1420
    %v1422 = vpop.f32.mrb[0].mxu0
    %1423 = vmatprep.mubr.f32.mxu0 0.0
    %1424 = vmatmul.mubr.f32.gmra.mrb[0].mxu0 %v1352
    %v1425 = vpop.f32.mrb[0].mxu0
    %v1426 = vadd.f32 0.0, %v1425
    %v1427 = vpop.f32.mrb[0].mxu0
    %1428 = vdwg.mxu0
    %1431 = vrot.lane.b32.xlu0 %v1421, 120
    %v1432 = vpop.permute.xlu0 %1431
    %1433 = vrot.lane.b32.xlu0 %v1426, 120
    %v1434 = vpop.permute.xlu0 %1433
    %v1437 = vadd.f32 %v55, %v1432
    %v1438 = vadd.f32 %v56, %v1434
    %v1439 = vsel %vm59, %v55, %v149
    %v1440 = vsel %vm59, %v56, %v150
    %vm1441 = vcmask 130048
    %v1442 = vsel %vm1441, %v1439, %v236
    %v1443 = vsel %vm1441, %v1440, %v237
    %vm1444 = vcmask 195584
    %v1445 = vsel %vm1444, %v1442, %v333
    %v1446 = vsel %vm1444, %v1443, %v334
    %vm1447 = vcmask 261120
    %v1448 = vsel %vm1447, %v1445, %v420
    %v1449 = vsel %vm1447, %v1446, %v421
    %vm1450 = vcmask 326656
    %v1451 = vsel %vm1450, %v1448, %v517
    %v1452 = vsel %vm1450, %v1449, %v518
    %vm1453 = vcmask 392192
    %v1454 = vsel %vm1453, %v1451, %v604
    %v1455 = vsel %vm1453, %v1452, %v605
    %vm1456 = vcmask 457728
    %v1457 = vsel %vm1456, %v1454, %v701
    %v1458 = vsel %vm1456, %v1455, %v702
    %vm1459 = vcmask 523264
    %v1460 = vsel %vm1459, %v1457, %v788
    %v1461 = vsel %vm1459, %v1458, %v789
    %vm1462 = vcmask 588800
    %v1463 = vsel %vm1462, %v1460, %v885
    %v1464 = vsel %vm1462, %v1461, %v886
    %vm1465 = vcmask 654336
    %v1466 = vsel %vm1465, %v1463, %v972
    %v1467 = vsel %vm1465, %v1464, %v973
    %vm1468 = vcmask 719872
    %v1469 = vsel %vm1468, %v1466, %v1069
    %v1470 = vsel %vm1468, %v1467, %v1070
    %vm1471 = vcmask 785408
    %v1472 = vsel %vm1471, %v1469, %v1156
    %v1473 = vsel %vm1471, %v1470, %v1157
    %vm1474 = vcmask 850944
    %v1475 = vsel %vm1474, %v1472, %v1253
    %v1476 = vsel %vm1474, %v1473, %v1254
    %vm1477 = vcmask 916480
    %v1478 = vsel %vm1477, %v1475, %v1340
    %v1479 = vsel %vm1477, %v1476, %v1341
    %vm1480 = vcmask 982016
    %v1481 = vsel %vm1480, %v1478, %v1437
    %v1482 = vsel %vm1480, %v1479, %v1438
    %vm1483 = vcmp.gt.f32.partialorder %v1481, 0.0
    %vm1484 = vcmp.gt.f32.partialorder %v1482, 0.0
    %v1485 = vmul.f32 %v1481, 0.01
    %v1486 = vmul.f32 %v1482, 0.01
    %v1487 = vsel %vm1483, %v1481, %v1485
    %v1488 = vsel %vm1484, %v1482, %v1486
    %v1489 = vld [vmem:[%s3] sm:$0xff]
    %v1490 = vld [vmem:[%s3 + $0x8] sm:$0xff]
    %v1491 = vld [vmem:[%s3 + $0x10] sm:$0xff]
    %v1492 = vld [vmem:[%s3 + $0x18] sm:$0xff]
    %v1493 = vld [vmem:[%s3 + $0x20] sm:$0xff]
    %v1494 = vld [vmem:[%s3 + $0x28] sm:$0xff]
    %v1495 = vld [vmem:[%s3 + $0x30] sm:$0xff]
    %v1496 = vld [vmem:[%s3 + $0x38] sm:$0xff]
    %v1497 = vld [vmem:[%s3 + $0x40] sm:$0xff]
    %v1498 = vld [vmem:[%s3 + $0x48] sm:$0xff]
    %v1499 = vld [vmem:[%s3 + $0x50] sm:$0xff]
    %v1500 = vld [vmem:[%s3 + $0x58] sm:$0xff]
    %v1501 = vld [vmem:[%s3 + $0x60] sm:$0xff]
    %v1502 = vld [vmem:[%s3 + $0x68] sm:$0xff]
    %v1503 = vld [vmem:[%s3 + $0x70] sm:$0xff]
    %v1504 = vld [vmem:[%s3 + $0x78] sm:$0xff]
    %v1505 = vld [vmem:[%s5] sm:$0x1]
    %v1506 = vlaneseq
    %v1507 = vshrl.u32 %v1506, 7
    %v1508 = vsub.s32 0, %v1507
    %v1509 = vrot.slane %v1505, %v1508
    %1510 = vmatprep.subr.mxu0 0.0
    %1511 = vmatpush1.msra.mxu0 %v1489
    %1512 = vmatprep.subr.mxu0 0.0
    %1513 = vmatpush1.msra.mxu0 %v1490
    %1514 = vmatprep.subr.mxu0 0.0
    %1515 = vmatpush1.msra.mxu0 %v1491
    %1516 = vmatprep.subr.mxu0 0.0
    %1517 = vmatpush1.msra.mxu0 %v1492
    %1518 = vmatprep.subr.mxu0 0.0
    %1519 = vmatpush1.msra.mxu0 %v1493
    %1520 = vmatprep.subr.mxu0 0.0
    %1521 = vmatpush1.msra.mxu0 %v1494
    %1522 = vmatprep.subr.mxu0 0.0
    %1523 = vmatpush1.msra.mxu0 %v1495
    %1524 = vmatprep.subr.mxu0 0.0
    %1525 = vmatpush1.msra.mxu0 %v1496
    %1526 = vmatprep.subr.mxu0 0.0
    %1527 = vmatpush1.msra.mxu0 %v1497
    %1528 = vmatprep.subr.mxu0 0.0
    %1529 = vmatpush1.msra.mxu0 %v1498
    %1530 = vmatprep.subr.mxu0 0.0
    %1531 = vmatpush1.msra.mxu0 %v1499
    %1532 = vmatprep.subr.mxu0 0.0
    %1533 = vmatpush1.msra.mxu0 %v1500
    %1534 = vmatprep.subr.mxu0 0.0
    %1535 = vmatpush1.msra.mxu0 %v1501
    %1536 = vmatprep.subr.mxu0 0.0
    %1537 = vmatpush1.msra.mxu0 %v1502
    %1538 = vmatprep.subr.mxu0 0.0
    %1539 = vmatpush1.msra.mxu0 %v1503
    %1540 = vmatprep.subr.mxu0 0.0
    %1541 = vmatpush1.msra.mxu0 %v1504
    %1542 = vmatprep.subr.mxu0 0.0
    %1543 = vmatpush1.msra.mxu0 0.0
    %1544 = vmatprep.subr.mxu0 0.0
    %1545 = vmatpush1.msra.mxu0 0.0
    %1546 = vmatprep.subr.mxu0 0.0
    %1547 = vmatpush1.msra.mxu0 0.0
    %1548 = vmatprep.subr.mxu0 0.0
    %1549 = vmatpush1.msra.mxu0 0.0
    %1550 = vmatprep.subr.mxu0 0.0
    %1551 = vmatpush1.msra.mxu0 0.0
    %1552 = vmatprep.subr.mxu0 0.0
    %1553 = vmatpush1.msra.mxu0 0.0
    %1554 = vmatprep.subr.mxu0 0.0
    %1555 = vmatpush1.msra.mxu0 0.0
    %1556 = vmatprep.subr.mxu0 0.0
    %1557 = vmatpush1.msra.mxu0 0.0
    %1558 = vmatprep.subr.mxu0 0.0
    %1559 = vmatpush1.msra.mxu0 0.0
    %1560 = vmatprep.subr.mxu0 0.0
    %1561 = vmatpush1.msra.mxu0 0.0
    %1562 = vmatprep.subr.mxu0 0.0
    %1563 = vmatpush1.msra.mxu0 0.0
    %1564 = vmatprep.subr.mxu0 0.0
    %1565 = vmatpush1.msra.mxu0 0.0
    %1566 = vmatprep.subr.mxu0 0.0
    %1567 = vmatpush1.msra.mxu0 0.0
    %1568 = vmatprep.subr.mxu0 0.0
    %1569 = vmatpush1.msra.mxu0 0.0
    %1570 = vmatprep.subr.mxu0 0.0
    %1571 = vmatpush1.msra.mxu0 0.0
    %1572 = vmatprep.subr.mxu0 0.0
    %1573 = vmatpush1.msra.mxu0 0.0
    %1574 = vmatprep.mubr.f32.mxu0 0.0
    %1575 = vmatmul.mubr.f32.gmra.mrb[0].mxu0 %v1487
    %v1576 = vpop.f32.mrb[0].mxu0
    %v1577 = vadd.f32 %v1509, %v1576
    %v1578 = vpop.f32.mrb[0].mxu0
    %1579 = vmatprep.mubr.f32.mxu0 0.0
    %1580 = vmatmul.mubr.f32.gmra.mrb[0].mxu0 %v1488
    %v1581 = vpop.f32.mrb[0].mxu0
    %v1582 = vadd.f32 %v1509, %v1581
    %v1583 = vpop.f32.mrb[0].mxu0
    %1584 = vdwg.mxu0
    %vm1585 = vcmp.gt.f32.partialorder %v1577, 0.0
    %vm1586 = vcmp.gt.f32.partialorder %v1582, 0.0
    %v1587 = vmul.f32 %v1577, 0.01
    %v1588 = vmul.f32 %v1582, 0.01
    %v1589 = vsel %vm1585, %v1577, %v1587
    %v1590 = vsel %vm1586, %v1582, %v1588
    %v1591 = vld [vmem:[#allocation2] sm:$0xff]
    %v1592 = vld [vmem:[#allocation2 + $0x8] sm:$0xff]
    %v1593 = vld [vmem:[#allocation2 + $0x10] sm:$0xff]
    %v1594 = vld [vmem:[#allocation2 + $0x18] sm:$0xff]
    %v1595 = vld [vmem:[#allocation2 + $0x20] sm:$0xff]
    %v1596 = vld [vmem:[#allocation2 + $0x28] sm:$0xff]
    %v1597 = vld [vmem:[#allocation2 + $0x30] sm:$0xff]
    %v1598 = vld [vmem:[#allocation2 + $0x38] sm:$0xff]
    %v1599 = vld [vmem:[#allocation2 + $0x40] sm:$0xff]
    %v1600 = vld [vmem:[#allocation2 + $0x48] sm:$0xff]
    %v1601 = vld [vmem:[#allocation2 + $0x50] sm:$0xff]
    %v1602 = vld [vmem:[#allocation2 + $0x58] sm:$0xff]
    %v1603 = vld [vmem:[#allocation2 + $0x60] sm:$0xff]
    %v1604 = vld [vmem:[#allocation2 + $0x68] sm:$0xff]
    %v1605 = vld [vmem:[#allocation2 + $0x70] sm:$0xff]
    %v1606 = vld [vmem:[#allocation2 + $0x78] sm:$0xff]
    %v1607 = vld [vmem:[%s5 + $0x1] sm:$0x1]
    %v1608 = vlaneseq
    %v1609 = vshrl.u32 %v1608, 7
    %v1610 = vsub.s32 0, %v1609
    %v1611 = vrot.slane %v1607, %v1610
    %1612 = vmatprep.subr.mxu0 0.0
    %1613 = vmatpush1.msra.mxu0 %v1591
    %1614 = vmatprep.subr.mxu0 0.0
    %1615 = vmatpush1.msra.mxu0 %v1592
    %1616 = vmatprep.subr.mxu0 0.0
    %1617 = vmatpush1.msra.mxu0 %v1593
    %1618 = vmatprep.subr.mxu0 0.0
    %1619 = vmatpush1.msra.mxu0 %v1594
    %1620 = vmatprep.subr.mxu0 0.0
    %1621 = vmatpush1.msra.mxu0 %v1595
    %1622 = vmatprep.subr.mxu0 0.0
    %1623 = vmatpush1.msra.mxu0 %v1596
    %1624 = vmatprep.subr.mxu0 0.0
    %1625 = vmatpush1.msra.mxu0 %v1597
    %1626 = vmatprep.subr.mxu0 0.0
    %1627 = vmatpush1.msra.mxu0 %v1598
    %1628 = vmatprep.subr.mxu0 0.0
    %1629 = vmatpush1.msra.mxu0 %v1599
    %1630 = vmatprep.subr.mxu0 0.0
    %1631 = vmatpush1.msra.mxu0 %v1600
    %1632 = vmatprep.subr.mxu0 0.0
    %1633 = vmatpush1.msra.mxu0 %v1601
    %1634 = vmatprep.subr.mxu0 0.0
    %1635 = vmatpush1.msra.mxu0 %v1602
    %1636 = vmatprep.subr.mxu0 0.0
    %1637 = vmatpush1.msra.mxu0 %v1603
    %1638 = vmatprep.subr.mxu0 0.0
    %1639 = vmatpush1.msra.mxu0 %v1604
    %1640 = vmatprep.subr.mxu0 0.0
    %1641 = vmatpush1.msra.mxu0 %v1605
    %1642 = vmatprep.subr.mxu0 0.0
    %1643 = vmatpush1.msra.mxu0 %v1606
    %1644 = vmatprep.subr.mxu0 0.0
    %1645 = vmatpush1.msra.mxu0 0.0
    %1646 = vmatprep.subr.mxu0 0.0
    %1647 = vmatpush1.msra.mxu0 0.0
    %1648 = vmatprep.subr.mxu0 0.0
    %1649 = vmatpush1.msra.mxu0 0.0
    %1650 = vmatprep.subr.mxu0 0.0
    %1651 = vmatpush1.msra.mxu0 0.0
    %1652 = vmatprep.subr.mxu0 0.0
    %1653 = vmatpush1.msra.mxu0 0.0
    %1654 = vmatprep.subr.mxu0 0.0
    %1655 = vmatpush1.msra.mxu0 0.0
    %1656 = vmatprep.subr.mxu0 0.0
    %1657 = vmatpush1.msra.mxu0 0.0
    %1658 = vmatprep.subr.mxu0 0.0
    %1659 = vmatpush1.msra.mxu0 0.0
    %1660 = vmatprep.subr.mxu0 0.0
    %1661 = vmatpush1.msra.mxu0 0.0
    %1662 = vmatprep.subr.mxu0 0.0
    %1663 = vmatpush1.msra.mxu0 0.0
    %1664 = vmatprep.subr.mxu0 0.0
    %1665 = vmatpush1.msra.mxu0 0.0
    %1666 = vmatprep.subr.mxu0 0.0
    %1667 = vmatpush1.msra.mxu0 0.0
    %1668 = vmatprep.subr.mxu0 0.0
    %1669 = vmatpush1.msra.mxu0 0.0
    %1670 = vmatprep.subr.mxu0 0.0
    %1671 = vmatpush1.msra.mxu0 0.0
    %1672 = vmatprep.subr.mxu0 0.0
    %1673 = vmatpush1.msra.mxu0 0.0
    %1674 = vmatprep.subr.mxu0 0.0
    %1675 = vmatpush1.msra.mxu0 0.0
    %1676 = vmatprep.mubr.f32.mxu0 0.0
    %1677 = vmatmul.mubr.f32.gmra.mrb[0].mxu0 %v1589
    %v1678 = vpop.f32.mrb[0].mxu0
    %v1679 = vadd.f32 %v1611, %v1678
    %v1680 = vpop.f32.mrb[0].mxu0
    %1681 = vmatprep.mubr.f32.mxu0 0.0
    %1682 = vmatmul.mubr.f32.gmra.mrb[0].mxu0 %v1590
    %v1683 = vpop.f32.mrb[0].mxu0
    %v1684 = vadd.f32 %v1611, %v1683
    %v1685 = vpop.f32.mrb[0].mxu0
    %1686 = vdwg.mxu0
    %vm1687 = vcmp.gt.f32.partialorder %v1679, 0.0
    %vm1688 = vcmp.gt.f32.partialorder %v1684, 0.0
    %v1689 = vmul.f32 %v1679, 0.01
    %v1690 = vmul.f32 %v1684, 0.01
    %v1691 = vsel %vm1687, %v1679, %v1689
    %v1692 = vsel %vm1688, %v1684, %v1690
    %s1693 = scalar_lea.vmem [#allocation2], 128
    %v1694 = vld [vmem:[%s1693] sm:$0xff]
    %v1695 = vld [vmem:[%s1693 + $0x8] sm:$0xff]
    %v1696 = vld [vmem:[%s1693 + $0x10] sm:$0xff]
    %v1697 = vld [vmem:[%s1693 + $0x18] sm:$0xff]
    %v1698 = vld [vmem:[%s1693 + $0x20] sm:$0xff]
    %v1699 = vld [vmem:[%s1693 + $0x28] sm:$0xff]
    %v1700 = vld [vmem:[%s1693 + $0x30] sm:$0xff]
    %v1701 = vld [vmem:[%s1693 + $0x38] sm:$0xff]
    %v1702 = vld [vmem:[%s1693 + $0x40] sm:$0xff]
    %v1703 = vld [vmem:[%s1693 + $0x48] sm:$0xff]
    %v1704 = vld [vmem:[%s1693 + $0x50] sm:$0xff]
    %v1705 = vld [vmem:[%s1693 + $0x58] sm:$0xff]
    %v1706 = vld [vmem:[%s1693 + $0x60] sm:$0xff]
    %v1707 = vld [vmem:[%s1693 + $0x68] sm:$0xff]
    %v1708 = vld [vmem:[%s1693 + $0x70] sm:$0xff]
    %v1709 = vld [vmem:[%s1693 + $0x78] sm:$0xff]
    %v1710 = vld [vmem:[%s5 + $0x2] sm:$0x1]
    %v1711 = vlaneseq
    %v1712 = vshrl.u32 %v1711, 7
    %v1713 = vsub.s32 0, %v1712
    %v1714 = vrot.slane %v1710, %v1713
    %1715 = vmatprep.subr.mxu0 0.0
    %1716 = vmatpush1.msra.mxu0 %v1694
    %1717 = vmatprep.subr.mxu0 0.0
    %1718 = vmatpush1.msra.mxu0 %v1695
    %1719 = vmatprep.subr.mxu0 0.0
    %1720 = vmatpush1.msra.mxu0 %v1696
    %1721 = vmatprep.subr.mxu0 0.0
    %1722 = vmatpush1.msra.mxu0 %v1697
    %1723 = vmatprep.subr.mxu0 0.0
    %1724 = vmatpush1.msra.mxu0 %v1698
    %1725 = vmatprep.subr.mxu0 0.0
    %1726 = vmatpush1.msra.mxu0 %v1699
    %1727 = vmatprep.subr.mxu0 0.0
    %1728 = vmatpush1.msra.mxu0 %v1700
    %1729 = vmatprep.subr.mxu0 0.0
    %1730 = vmatpush1.msra.mxu0 %v1701
    %1731 = vmatprep.subr.mxu0 0.0
    %1732 = vmatpush1.msra.mxu0 %v1702
    %1733 = vmatprep.subr.mxu0 0.0
    %1734 = vmatpush1.msra.mxu0 %v1703
    %1735 = vmatprep.subr.mxu0 0.0
    %1736 = vmatpush1.msra.mxu0 %v1704
    %1737 = vmatprep.subr.mxu0 0.0
    %1738 = vmatpush1.msra.mxu0 %v1705
    %1739 = vmatprep.subr.mxu0 0.0
    %1740 = vmatpush1.msra.mxu0 %v1706
    %1741 = vmatprep.subr.mxu0 0.0
    %1742 = vmatpush1.msra.mxu0 %v1707
    %1743 = vmatprep.subr.mxu0 0.0
    %1744 = vmatpush1.msra.mxu0 %v1708
    %1745 = vmatprep.subr.mxu0 0.0
    %1746 = vmatpush1.msra.mxu0 %v1709
    %1747 = vmatprep.subr.mxu0 0.0
    %1748 = vmatpush1.msra.mxu0 0.0
    %1749 = vmatprep.subr.mxu0 0.0
    %1750 = vmatpush1.msra.mxu0 0.0
    %1751 = vmatprep.subr.mxu0 0.0
    %1752 = vmatpush1.msra.mxu0 0.0
    %1753 = vmatprep.subr.mxu0 0.0
    %1754 = vmatpush1.msra.mxu0 0.0
    %1755 = vmatprep.subr.mxu0 0.0
    %1756 = vmatpush1.msra.mxu0 0.0
    %1757 = vmatprep.subr.mxu0 0.0
    %1758 = vmatpush1.msra.mxu0 0.0
    %1759 = vmatprep.subr.mxu0 0.0
    %1760 = vmatpush1.msra.mxu0 0.0
    %1761 = vmatprep.subr.mxu0 0.0
    %1762 = vmatpush1.msra.mxu0 0.0
    %1763 = vmatprep.subr.mxu0 0.0
    %1764 = vmatpush1.msra.mxu0 0.0
    %1765 = vmatprep.subr.mxu0 0.0
    %1766 = vmatpush1.msra.mxu0 0.0
    %1767 = vmatprep.subr.mxu0 0.0
    %1768 = vmatpush1.msra.mxu0 0.0
    %1769 = vmatprep.subr.mxu0 0.0
    %1770 = vmatpush1.msra.mxu0 0.0
    %1771 = vmatprep.subr.mxu0 0.0
    %1772 = vmatpush1.msra.mxu0 0.0
    %1773 = vmatprep.subr.mxu0 0.0
    %1774 = vmatpush1.msra.mxu0 0.0
    %1775 = vmatprep.subr.mxu0 0.0
    %1776 = vmatpush1.msra.mxu0 0.0
    %1777 = vmatprep.subr.mxu0 0.0
    %1778 = vmatpush1.msra.mxu0 0.0
    %1779 = vmatprep.mubr.f32.mxu0 0.0
    %1780 = vmatmul.mubr.f32.gmra.mrb[0].mxu0 %v1691
    %v1781 = vpop.f32.mrb[0].mxu0
    %v1782 = vadd.f32 %v1714, %v1781
    %v1783 = vpop.f32.mrb[0].mxu0
    %1784 = vmatprep.mubr.f32.mxu0 0.0
    %1785 = vmatmul.mubr.f32.gmra.mrb[0].mxu0 %v1692
    %v1786 = vpop.f32.mrb[0].mxu0
    %v1787 = vadd.f32 %v1714, %v1786
    %v1788 = vpop.f32.mrb[0].mxu0
    %1789 = vdwg.mxu0
    %vm1790 = vcmp.gt.f32.partialorder %v1782, 0.0
    %vm1791 = vcmp.gt.f32.partialorder %v1787, 0.0
    %v1792 = vmul.f32 %v1782, 0.01
    %v1793 = vmul.f32 %v1787, 0.01
    %v1794 = vsel %vm1790, %v1782, %v1792
    %v1795 = vsel %vm1791, %v1787, %v1793
    %s1796 = scalar_lea.vmem [#allocation2], 256
    %v1797 = vld [vmem:[%s1796] sm:$0xff]
    %v1798 = vld [vmem:[%s1796 + $0x8] sm:$0xff]
    %v1799 = vld [vmem:[%s1796 + $0x10] sm:$0xff]
    %v1800 = vld [vmem:[%s1796 + $0x18] sm:$0xff]
    %v1801 = vld [vmem:[%s1796 + $0x20] sm:$0xff]
    %v1802 = vld [vmem:[%s1796 + $0x28] sm:$0xff]
    %v1803 = vld [vmem:[%s1796 + $0x30] sm:$0xff]
    %v1804 = vld [vmem:[%s1796 + $0x38] sm:$0xff]
    %v1805 = vld [vmem:[%s1796 + $0x40] sm:$0xff]
    %v1806 = vld [vmem:[%s1796 + $0x48] sm:$0xff]
    %v1807 = vld [vmem:[%s1796 + $0x50] sm:$0xff]
    %v1808 = vld [vmem:[%s1796 + $0x58] sm:$0xff]
    %v1809 = vld [vmem:[%s1796 + $0x60] sm:$0xff]
    %v1810 = vld [vmem:[%s1796 + $0x68] sm:$0xff]
    %v1811 = vld [vmem:[%s1796 + $0x70] sm:$0xff]
    %v1812 = vld [vmem:[%s1796 + $0x78] sm:$0xff]
    %v1813 = vld [vmem:[%s5 + $0x3] sm:$0x1]
    %v1814 = vlaneseq
    %v1815 = vshrl.u32 %v1814, 7
    %v1816 = vsub.s32 0, %v1815
    %v1817 = vrot.slane %v1813, %v1816
    %1818 = vmatprep.subr.mxu0 0.0
    %1819 = vmatpush1.msra.mxu0 %v1797
    %1820 = vmatprep.subr.mxu0 0.0
    %1821 = vmatpush1.msra.mxu0 %v1798
    %1822 = vmatprep.subr.mxu0 0.0
    %1823 = vmatpush1.msra.mxu0 %v1799
    %1824 = vmatprep.subr.mxu0 0.0
    %1825 = vmatpush1.msra.mxu0 %v1800
    %1826 = vmatprep.subr.mxu0 0.0
    %1827 = vmatpush1.msra.mxu0 %v1801
    %1828 = vmatprep.subr.mxu0 0.0
    %1829 = vmatpush1.msra.mxu0 %v1802
    %1830 = vmatprep.subr.mxu0 0.0
    %1831 = vmatpush1.msra.mxu0 %v1803
    %1832 = vmatprep.subr.mxu0 0.0
    %1833 = vmatpush1.msra.mxu0 %v1804
    %1834 = vmatprep.subr.mxu0 0.0
    %1835 = vmatpush1.msra.mxu0 %v1805
    %1836 = vmatprep.subr.mxu0 0.0
    %1837 = vmatpush1.msra.mxu0 %v1806
    %1838 = vmatprep.subr.mxu0 0.0
    %1839 = vmatpush1.msra.mxu0 %v1807
    %1840 = vmatprep.subr.mxu0 0.0
    %1841 = vmatpush1.msra.mxu0 %v1808
    %1842 = vmatprep.subr.mxu0 0.0
    %1843 = vmatpush1.msra.mxu0 %v1809
    %1844 = vmatprep.subr.mxu0 0.0
    %1845 = vmatpush1.msra.mxu0 %v1810
    %1846 = vmatprep.subr.mxu0 0.0
    %1847 = vmatpush1.msra.mxu0 %v1811
    %1848 = vmatprep.subr.mxu0 0.0
    %1849 = vmatpush1.msra.mxu0 %v1812
    %1850 = vmatprep.subr.mxu0 0.0
    %1851 = vmatpush1.msra.mxu0 0.0
    %1852 = vmatprep.subr.mxu0 0.0
    %1853 = vmatpush1.msra.mxu0 0.0
    %1854 = vmatprep.subr.mxu0 0.0
    %1855 = vmatpush1.msra.mxu0 0.0
    %1856 = vmatprep.subr.mxu0 0.0
    %1857 = vmatpush1.msra.mxu0 0.0
    %1858 = vmatprep.subr.mxu0 0.0
    %1859 = vmatpush1.msra.mxu0 0.0
    %1860 = vmatprep.subr.mxu0 0.0
    %1861 = vmatpush1.msra.mxu0 0.0
    %1862 = vmatprep.subr.mxu0 0.0
    %1863 = vmatpush1.msra.mxu0 0.0
    %1864 = vmatprep.subr.mxu0 0.0
    %1865 = vmatpush1.msra.mxu0 0.0
    %1866 = vmatprep.subr.mxu0 0.0
    %1867 = vmatpush1.msra.mxu0 0.0
    %1868 = vmatprep.subr.mxu0 0.0
    %1869 = vmatpush1.msra.mxu0 0.0
    %1870 = vmatprep.subr.mxu0 0.0
    %1871 = vmatpush1.msra.mxu0 0.0
    %1872 = vmatprep.subr.mxu0 0.0
    %1873 = vmatpush1.msra.mxu0 0.0
    %1874 = vmatprep.subr.mxu0 0.0
    %1875 = vmatpush1.msra.mxu0 0.0
    %1876 = vmatprep.subr.mxu0 0.0
    %1877 = vmatpush1.msra.mxu0 0.0
    %1878 = vmatprep.subr.mxu0 0.0
    %1879 = vmatpush1.msra.mxu0 0.0
    %1880 = vmatprep.subr.mxu0 0.0
    %1881 = vmatpush1.msra.mxu0 0.0
    %1882 = vmatprep.mubr.f32.mxu0 0.0
    %1883 = vmatmul.mubr.f32.gmra.mrb[0].mxu0 %v1794
    %v1884 = vpop.f32.mrb[0].mxu0
    %v1885 = vadd.f32 %v1817, %v1884
    %v1886 = vpop.f32.mrb[0].mxu0
    %1887 = vmatprep.mubr.f32.mxu0 0.0
    %1888 = vmatmul.mubr.f32.gmra.mrb[0].mxu0 %v1795
    %v1889 = vpop.f32.mrb[0].mxu0
    %v1890 = vadd.f32 %v1817, %v1889
    %v1891 = vpop.f32.mrb[0].mxu0
    %1892 = vdwg.mxu0
    %vm1893 = vcmp.gt.f32.partialorder %v1885, 0.0
    %vm1894 = vcmp.gt.f32.partialorder %v1890, 0.0
    %v1895 = vmul.f32 %v1885, 0.01
    %v1896 = vmul.f32 %v1890, 0.01
    %v1897 = vsel %vm1893, %v1885, %v1895
    %v1898 = vsel %vm1894, %v1890, %v1896
    %v1899 = vld [vmem:[%s6] sm:$0x1]
    %v1900 = vld [vmem:[%s6 + $0x1] sm:$0x1]
    %1902 = vset.pattern.permute.xlu0 0
    %1903 = vperm.xlu0 %1902, %v1900
    %v1904 = vpop.permute.xlu0 %1903
    %1906 = vmatprep.subr.mxu0 0.0
    %1907 = vmatpush1.xpose.msra.mxu0 %v1897
    %1908 = vmatprep.subr.mxu0 0.0
    %1909 = vmatpush1.xpose.msra.mxu0 %v1898
    %1910 = vmatprep.subr.mxu0 0.0
    %1911 = vmatpush1.xpose.msra.mxu0 0.0
    %1912 = vmatprep.subr.mxu0 0.0
    %1913 = vmatpush1.xpose.msra.mxu0 0.0
    %1914 = vmatprep.subr.mxu0 0.0
    %1915 = vmatpush1.xpose.msra.mxu0 0.0
    %1916 = vmatprep.subr.mxu0 0.0
    %1917 = vmatpush1.xpose.msra.mxu0 0.0
    %1918 = vmatprep.subr.mxu0 0.0
    %1919 = vmatpush1.xpose.msra.mxu0 0.0
    %1920 = vmatprep.subr.mxu0 0.0
    %1921 = vmatpush1.xpose.msra.mxu0 0.0
    %1922 = vmatprep.subr.mxu0 0.0
    %1923 = vmatpush1.xpose.msra.mxu0 0.0
    %1924 = vmatprep.subr.mxu0 0.0
    %1925 = vmatpush1.xpose.msra.mxu0 0.0
    %1926 = vmatprep.subr.mxu0 0.0
    %1927 = vmatpush1.xpose.msra.mxu0 0.0
    %1928 = vmatprep.subr.mxu0 0.0
    %1929 = vmatpush1.xpose.msra.mxu0 0.0
    %1930 = vmatprep.subr.mxu0 0.0
    %1931 = vmatpush1.xpose.msra.mxu0 0.0
    %1932 = vmatprep.subr.mxu0 0.0
    %1933 = vmatpush1.xpose.msra.mxu0 0.0
    %1934 = vmatprep.subr.mxu0 0.0
    %1935 = vmatpush1.xpose.msra.mxu0 0.0
    %1936 = vmatprep.subr.mxu0 0.0
    %1937 = vmatpush1.xpose.msra.mxu0 0.0
    %1938 = vmatprep.subr.mxu0 0.0
    %1939 = vmatpush1.xpose.msra.mxu0 0.0
    %1940 = vmatprep.subr.mxu0 0.0
    %1941 = vmatpush1.xpose.msra.mxu0 0.0
    %1942 = vmatprep.subr.mxu0 0.0
    %1943 = vmatpush1.xpose.msra.mxu0 0.0
    %1944 = vmatprep.subr.mxu0 0.0
    %1945 = vmatpush1.xpose.msra.mxu0 0.0
    %1946 = vmatprep.subr.mxu0 0.0
    %1947 = vmatpush1.xpose.msra.mxu0 0.0
    %1948 = vmatprep.subr.mxu0 0.0
    %1949 = vmatpush1.xpose.msra.mxu0 0.0
    %1950 = vmatprep.subr.mxu0 0.0
    %1951 = vmatpush1.xpose.msra.mxu0 0.0
    %1952 = vmatprep.subr.mxu0 0.0
    %1953 = vmatpush1.xpose.msra.mxu0 0.0
    %1954 = vmatprep.subr.mxu0 0.0
    %1955 = vmatpush1.xpose.msra.mxu0 0.0
    %1956 = vmatprep.subr.mxu0 0.0
    %1957 = vmatpush1.xpose.msra.mxu0 0.0
    %1958 = vmatprep.subr.mxu0 0.0
    %1959 = vmatpush1.xpose.msra.mxu0 0.0
    %1960 = vmatprep.subr.mxu0 0.0
    %1961 = vmatpush1.xpose.msra.mxu0 0.0
    %1962 = vmatprep.subr.mxu0 0.0
    %1963 = vmatpush1.xpose.msra.mxu0 0.0
    %1964 = vmatprep.subr.mxu0 0.0
    %1965 = vmatpush1.xpose.msra.mxu0 0.0
    %1966 = vmatprep.subr.mxu0 0.0
    %1967 = vmatpush1.xpose.msra.mxu0 0.0
    %1968 = vmatprep.subr.mxu0 0.0
    %1969 = vmatpush1.xpose.msra.mxu0 0.0
    %1970 = vmatprep.mubr.f32.mxu0 0.0
    %1971 = vmatmul.mubr.f32.gmra.mrb[0].mxu0 %v1899
    %v1972 = vpop.f32.mrb[0].mxu0
    %v1973 = vadd.f32 %v1904, %v1972
    %v1974 = vpop.f32.mrb[0].mxu0
    %1975 = vdwg.mxu0
    %vm1976 = vcmask 122880
    %1977 = vst.msk [vmem:[#allocation5] sm:$0x1] %vm1976, %v1973
    // Predicated region
    $region34: #{tpu_custom_call.1} parent=1 // pred_check
      _
    $region35: #{tpu_custom_call.1} parent=1 // pred_check_branch
      %1979 = sbr.rel (0) target = $region37
    $region36: #{tpu_custom_call.1} parent=1 // pred_region
      %s1981 = ssub.s32 16, 16
      %1982 = vsyncadd [#allocation4], %s1981
      %s1984 = sshll.u32 [#allocation5], 4
      %s1985 = int_to_ptr.vmem [resolvable:$true] %s1984
      %1987 = dma.vmem_to_hbm [thread:$0]  %s1985, 16, %s7, [#allocation4]
    $region37: #{tpu_custom_call.1} parent=1 // pred_fallthru
      _
    // Predicated region
    $region38: #{tpu_custom_call.1} parent=1 // pred_check
      _
    $region39: #{tpu_custom_call.1} parent=1 // pred_check_branch
      %1989 = sbr.rel (0) target = $region41
    $region40: #{tpu_custom_call.1} parent=1 // pred_region
      %1990 = dma.done [#allocation4], 16
    $region41: #{tpu_custom_call.1} parent=1 // pred_fallthru
      _
    %1991 = vsyncpa [#allocation3], 1
    %1992 = vsyncpa [#allocation4], 1

</llo_original>
